<compile_context>
chip_gen: v7x
topology: tpu7x:2x2x1
jax: 0.10.0
libtpu: 0.0.40
codegen_flags: <defaults>
</compile_context>

<pallas_src>
import functools

import jax
import jax.numpy as jnp
from jax.experimental import pallas as pl
from jax.experimental.pallas import tpu as pltpu


def _round_up(x: int, m: int) -> int:
    return ((x + m - 1) // m) * m


def _continuous_ll_kernel(m_ref, p_ref, w1t_ref, b1c_ref, w2t_ref, b2c_ref,
                          fbt_ref, q_ref, vm_ref, vp_ref, *,
                          assume_symmetric_P: bool):
    # Shapes (all static):
    #   m_ref  : (Z,  TB)   latent mean, batch on lanes
    #   p_ref  : (ZZ, TB)   covariance rows (n*Z+m), batch on lanes
    #   w1t_ref: (H, Z)     b1c_ref: (H, 1)
    #   w2t_ref: (K, H)     b2c_ref: (K, 1)
    #   fbt_ref: (ZZ, K)    fbt[n*Z+m, k] = F_bank[k, n, m]
    #   q_ref  : (1, Z)     precomputed clamp(exp(uQ), 1e-4)
    #   vm_ref : (Z,  TB)   vp_ref: (ZZ, TB)
    Z, TB = m_ref.shape
    ZZ = p_ref.shape[0]
    K = w2t_ref.shape[0]

    # ---- per-latent-dim rows of m, each (1, TB) ---------------------------
    m_rows = [m_ref[z:z + 1, :] for z in range(Z)]

    # ---- alpha_net hidden layer: h = tanh(W1^T m + b1) --------------------
    # Z lane-wide outer-product MACs on the VPU (contraction dim Z is tiny).
    w1t = w1t_ref[...]                                        # (H, Z)
    acc = w1t[:, 0:1] * m_rows[0] + b1c_ref[...]              # (H, TB)
    for z in range(1, Z):
        acc = acc + w1t[:, z:z + 1] * m_rows[z]
    h = jnp.tanh(acc)                                         # EUP

    # ---- alpha_net output layer: one lane-wide MXU matmul per tile --------
    logits = jnp.dot(w2t_ref[...], h,
                     preferred_element_type=jnp.float32) + b2c_ref[...]  # (K, TB)

    # ---- softmax over K (tiny, fully unrolled; no cross-lane reduce) ------
    lrows = [logits[k:k + 1, :] for k in range(K)]
    mx = lrows[0]
    for k in range(1, K):
        mx = jnp.maximum(mx, lrows[k])
    erows = [jnp.exp(l - mx) for l in lrows]
    den = erows[0]
    for k in range(1, K):
        den = den + erows[k]
    inv = 1.0 / den
    alpha = [e * inv for e in erows]                          # K x (1, TB)

    # ---- F rows: F[n,m,:] = sum_k F_bank[k,n,m] * alpha_k -----------------
    fbt = fbt_ref[...]                                        # (ZZ, K)

    def mix_row(i):
        r = fbt[i:i + 1, 0:1] * alpha[0]
        for k in range(1, K):
            r = r + fbt[i:i + 1, k:k + 1] * alpha[k]
        return r                                              # (1, TB)

    F_rows = [mix_row(i) for i in range(ZZ)]

    # ---- velocity_m[n,:] = sum_m F[n,m,:] * m[m,:] ------------------------
    vm_rows = []
    for n in range(Z):
        r = F_rows[n * Z + 0] * m_rows[0]
        for mm in range(1, Z):
            r = r + F_rows[n * Z + mm] * m_rows[mm]
        vm_rows.append(r)
    vm_ref[...] = jnp.concatenate(vm_rows, axis=0)            # dense store

    # ---- velocity_P = F P + P F^T + diag(q) -------------------------------
    q = q_ref[...]                                            # (1, Z)

    def p_row(i):                     # load P rows at point of use (cheap vld)
        return p_ref[i:i + 1, :]

    def fp_entry(n, k):               # (F P)[n,k,:]
        r = F_rows[n * Z + 0] * p_row(0 * Z + k)
        for mm in range(1, Z):
            r = r + F_rows[n * Z + mm] * p_row(mm * Z + k)
        return r

    rows = [None] * ZZ
    if assume_symmetric_P:
        # P is a covariance => symmetric, so (P F^T)[n,k] == (F P)[k,n] and
        # velocity_P is itself symmetric: compute each unordered pair once.
        for n in range(Z):
            for k in range(n, Z):
                a = fp_entry(n, k)
                b = a if k == n else fp_entry(k, n)
                v = a + b
                if k == n:
                    v = v + q[0:1, n:n + 1]
                rows[n * Z + k] = v
                rows[k * Z + n] = v
    else:
        def pft_entry(n, k):          # (P F^T)[n,k,:]
            r = p_row(n * Z + 0) * F_rows[k * Z + 0]
            for mm in range(1, Z):
                r = r + p_row(n * Z + mm) * F_rows[k * Z + mm]
            return r

        for n in range(Z):
            for k in range(Z):
                v = fp_entry(n, k) + pft_entry(n, k)
                if k == n:
                    v = v + q[0:1, n:n + 1]
                rows[n * Z + k] = v

    # Dense, sublane-aligned stores (8 output rows at a time when possible).
    step = 8 if (ZZ % 8 == 0) else ZZ
    for s in range(0, ZZ, step):
        vp_ref[s:s + step, :] = jnp.concatenate(rows[s:s + step], axis=0)


def continuous_ll_forward(t, m, P, params, *, tile_b=512, assume_symmetric_P=True):
    """velocity_m, velocity_P = ContinuousLL.forward(t, (m, P)).

    `t` is accepted for signature parity with the PyTorch module but unused
    (the module's forward ignores it too).
    """
    del t
    W1, b1, W2, b2, F_bank, uQ = params
    B, Z = m.shape
    K = F_bank.shape[0]
    H = W1.shape[1]
    ZZ = Z * Z
    f32 = jnp.float32

    # Lane-dense layout: batch on the 128-lane (last) axis (layout plumbing).
    mT = m.astype(f32).T                                     # (Z, B)
    PT = P.astype(f32).reshape(B, ZZ).T                      # (ZZ, B)

    # Small parameters, laid out once for the kernel.
    w1t = W1.astype(f32).T                                   # (H, Z)
    b1c = b1.astype(f32).reshape(H, 1)                       # (H, 1)
    w2t = W2.astype(f32).T                                   # (K, H)
    b2c = b2.astype(f32).reshape(K, 1)                       # (K, 1)
    fbt = F_bank.astype(f32).reshape(K, ZZ).T                # (ZZ, K)
    # Q hoisted out of the kernel: only its diagonal is ever used.
    qdiag = jnp.maximum(jnp.exp(uQ.astype(f32)), 1e-4).reshape(1, Z)

    # Batch tile (multiple of 128 lanes); pad B up to a tile multiple.
    tb = _round_up(max(int(tile_b), 128), 128)
    tb = min(tb, _round_up(B, 128))
    Bp = _round_up(B, tb)
    if Bp != B:
        mT = jnp.pad(mT, ((0, 0), (0, Bp - B)))
        PT = jnp.pad(PT, ((0, 0), (0, Bp - B)))

    kernel = functools.partial(_continuous_ll_kernel,
                               assume_symmetric_P=assume_symmetric_P)

    vmT, vpT = pl.pallas_call(
        kernel,
        out_shape=(jax.ShapeDtypeStruct((Z, Bp), f32),
                   jax.ShapeDtypeStruct((ZZ, Bp), f32)),
        grid_spec=pltpu.PrefetchScalarGridSpec(
            num_scalar_prefetch=0,
            grid=(Bp // tb,),
            in_specs=[
                pl.BlockSpec((Z, tb), lambda i: (0, i)),      # m^T
                pl.BlockSpec((ZZ, tb), lambda i: (0, i)),     # P (flat)^T
                pl.BlockSpec((H, Z), lambda i: (0, 0)),       # W1^T
                pl.BlockSpec((H, 1), lambda i: (0, 0)),       # b1
                pl.BlockSpec((K, H), lambda i: (0, 0)),       # W2^T
                pl.BlockSpec((K, 1), lambda i: (0, 0)),       # b2
                pl.BlockSpec((ZZ, K), lambda i: (0, 0)),      # F bank (flat)^T
                pl.BlockSpec((1, Z), lambda i: (0, 0)),       # q diag
            ],
            out_specs=[
                pl.BlockSpec((Z, tb), lambda i: (0, i)),      # velocity_m^T
                pl.BlockSpec((ZZ, tb), lambda i: (0, i)),     # velocity_P (flat)^T
            ],
        ),
        compiler_params=pltpu.CompilerParams(
            dimension_semantics=("parallel",)),               # shards over TCs
    )(mT, PT, w1t, b1c, w2t, b2c, fbt, qdiag)

    vm = vmT[:, :B].T                                         # (B, Z)
    vP = vpT[:, :B].T.reshape(B, Z, Z)                        # (B, Z, Z)
    return vm, vP


def continuous_ll_reference(m, P, params):
    """Pure-JAX mirror of the PyTorch forward, for verification."""
    W1, b1, W2, b2, F_bank, uQ = params
    h = jnp.tanh(m @ W1 + b1)
    alpha = jax.nn.softmax(h @ W2 + b2, axis=-1)
    F = jnp.einsum('bk,knm->bnm', alpha, F_bank)
    vm = jnp.einsum('bnm,bm->bn', F, m)
    Q = jnp.diag(jnp.maximum(jnp.exp(uQ[0]), 1e-4))
    vP = jnp.matmul(F, P) + jnp.matmul(P, jnp.swapaxes(F, -1, -2)) + Q[None]
    return vm, vP


if __name__ == "__main__":
    # Small shapes consistent with the module: latent dim Z, mixture size K,
    # alpha_net hidden H, batch B. u_dim = 0 (no control input -> no B matrix).
    B, Z, K, H = 16, 4, 3, 32

    key = jax.random.PRNGKey(0)
    k_m, k_P, k_W1, k_W2, k_F, k_uQ = jax.random.split(key, 6)

    m = jax.random.normal(k_m, (B, Z), dtype=jnp.float32)
    A = jax.random.normal(k_P, (B, Z, Z), dtype=jnp.float32)
    P = jnp.matmul(A, jnp.swapaxes(A, -1, -2)) + 0.1 * jnp.eye(Z)  # SPD covariance

    # Deterministic "xavier-ish" parameter init (synthetic; no checkpoint load).
    W1 = jax.random.normal(k_W1, (Z, H), dtype=jnp.float32) * (2.0 / (Z + H)) ** 0.5
    b1 = jnp.zeros((1, H), dtype=jnp.float32)
    W2 = jax.random.normal(k_W2, (H, K), dtype=jnp.float32) * (2.0 / (H + K)) ** 0.5
    b2 = jnp.zeros((1, K), dtype=jnp.float32)
    F_bank = jax.random.normal(k_F, (K, Z, Z), dtype=jnp.float32) * 0.1
    uQ = jax.random.normal(k_uQ, (1, Z), dtype=jnp.float32) * 0.5

    params = (W1, b1, W2, b2, F_bank, uQ)
    t = jnp.linspace(0.0, 1.0, B)  # unused by forward, matches module signature

    vm_ref, vP_ref = continuous_ll_reference(m, P, params)

    # Default fast path (exploits symmetry of the covariance P).
    vm, vP = continuous_ll_forward(t, m, P, params)
    jax.block_until_ready((vm, vP))
    assert vm.shape == (B, Z) and vP.shape == (B, Z, Z)
    assert jnp.allclose(vm, vm_ref, rtol=1e-5, atol=1e-5)
    assert jnp.allclose(vP, vP_ref, rtol=1e-5, atol=1e-5)

    # Fallback path that does not assume P is symmetric (same results here).
    vm2, vP2 = continuous_ll_forward(t, m, P, params, assume_symmetric_P=False)
    jax.block_until_ready((vm2, vP2))
    assert jnp.allclose(vm2, vm_ref, rtol=1e-5, atol=1e-5)
    assert jnp.allclose(vP2, vP_ref, rtol=1e-5, atol=1e-5)

    print("KERNEL_OK")
</pallas_src>

<mosaic_0001>
module attributes {stable_mosaic.version = 11 : i64} {
  func.func @_continuous_ll_kernel(%arg0: i32, %arg1: memref<4x128xf32, #tpu.memory_space<vmem>>, %arg2: memref<16x128xf32, #tpu.memory_space<vmem>>, %arg3: memref<32x4xf32, #tpu.memory_space<vmem>>, %arg4: memref<32x1xf32, #tpu.memory_space<vmem>>, %arg5: memref<3x32xf32, #tpu.memory_space<vmem>>, %arg6: memref<3x1xf32, #tpu.memory_space<vmem>>, %arg7: memref<16x3xf32, #tpu.memory_space<vmem>>, %arg8: memref<1x4xf32, #tpu.memory_space<vmem>>, %arg9: memref<4x128xf32, #tpu.memory_space<vmem>>, %arg10: memref<16x128xf32, #tpu.memory_space<vmem>>) attributes {dimension_semantics = [#tpu.dimension_semantics<parallel>], iteration_bounds = array<i64: 1>, scalar_prefetch = 0 : i64, scratch_operands = 0 : i64, tpu.core_type = #tpu.core_type<tc>, window_params = [{transform_indices = @transform_0, window_bounds = array<i64: 4, 128>}, {transform_indices = @transform_1, window_bounds = array<i64: 16, 128>}, {pipeline_mode = #tpu.pipeline_mode<synchronous>, transform_indices = @transform_2, window_bounds = array<i64: 32, 4>}, {pipeline_mode = #tpu.pipeline_mode<synchronous>, transform_indices = @transform_3, window_bounds = array<i64: 32, 1>}, {pipeline_mode = #tpu.pipeline_mode<synchronous>, transform_indices = @transform_4, window_bounds = array<i64: 3, 32>}, {pipeline_mode = #tpu.pipeline_mode<synchronous>, transform_indices = @transform_5, window_bounds = array<i64: 3, 1>}, {pipeline_mode = #tpu.pipeline_mode<synchronous>, transform_indices = @transform_6, window_bounds = array<i64: 16, 3>}, {pipeline_mode = #tpu.pipeline_mode<synchronous>, transform_indices = @transform_7, window_bounds = array<i64: 1, 4>}, {transform_indices = @transform_8, window_bounds = array<i64: 4, 128>}, {transform_indices = @transform_9, window_bounds = array<i64: 16, 128>}]} {
    %c0 = arith.constant 0 : index
    %c0_0 = arith.constant 0 : index
    %0 = vector.load %arg1[%c0, %c0_0] : memref<4x128xf32, #tpu.memory_space<vmem>>, vector<1x128xf32>
    %c1 = arith.constant 1 : index
    %c0_1 = arith.constant 0 : index
    %1 = vector.load %arg1[%c1, %c0_1] : memref<4x128xf32, #tpu.memory_space<vmem>>, vector<1x128xf32>
    %c2 = arith.constant 2 : index
    %c0_2 = arith.constant 0 : index
    %2 = vector.load %arg1[%c2, %c0_2] : memref<4x128xf32, #tpu.memory_space<vmem>>, vector<1x128xf32>
    %c3 = arith.constant 3 : index
    %c0_3 = arith.constant 0 : index
    %3 = vector.load %arg1[%c3, %c0_3] : memref<4x128xf32, #tpu.memory_space<vmem>>, vector<1x128xf32>
    %c0_4 = arith.constant 0 : index
    %c0_5 = arith.constant 0 : index
    %4 = vector.load %arg3[%c0_4, %c0_5] : memref<32x4xf32, #tpu.memory_space<vmem>>, vector<32x4xf32>
    %5 = vector.extract_strided_slice %4 {offsets = [0, 0], sizes = [32, 1], strides = [1, 1]} : vector<32x4xf32> to vector<32x1xf32>
    %6 = vector.broadcast %5 : vector<32x1xf32> to vector<32x128xf32>
    %7 = vector.broadcast %0 : vector<1x128xf32> to vector<32x128xf32>
    %8 = arith.mulf %6, %7 : vector<32x128xf32>
    %c0_6 = arith.constant 0 : index
    %c0_7 = arith.constant 0 : index
    %9 = vector.load %arg4[%c0_6, %c0_7] : memref<32x1xf32, #tpu.memory_space<vmem>>, vector<32x1xf32>
    %10 = vector.broadcast %9 : vector<32x1xf32> to vector<32x128xf32>
    %11 = arith.addf %8, %10 : vector<32x128xf32>
    %12 = vector.extract_strided_slice %4 {offsets = [0, 1], sizes = [32, 1], strides = [1, 1]} : vector<32x4xf32> to vector<32x1xf32>
    %13 = vector.broadcast %12 : vector<32x1xf32> to vector<32x128xf32>
    %14 = vector.broadcast %1 : vector<1x128xf32> to vector<32x128xf32>
    %15 = arith.mulf %13, %14 : vector<32x128xf32>
    %16 = arith.addf %11, %15 : vector<32x128xf32>
    %17 = vector.extract_strided_slice %4 {offsets = [0, 2], sizes = [32, 1], strides = [1, 1]} : vector<32x4xf32> to vector<32x1xf32>
    %18 = vector.broadcast %17 : vector<32x1xf32> to vector<32x128xf32>
    %19 = vector.broadcast %2 : vector<1x128xf32> to vector<32x128xf32>
    %20 = arith.mulf %18, %19 : vector<32x128xf32>
    %21 = arith.addf %16, %20 : vector<32x128xf32>
    %22 = vector.extract_strided_slice %4 {offsets = [0, 3], sizes = [32, 1], strides = [1, 1]} : vector<32x4xf32> to vector<32x1xf32>
    %23 = vector.broadcast %22 : vector<32x1xf32> to vector<32x128xf32>
    %24 = vector.broadcast %3 : vector<1x128xf32> to vector<32x128xf32>
    %25 = arith.mulf %23, %24 : vector<32x128xf32>
    %26 = arith.addf %21, %25 : vector<32x128xf32>
    %27 = math.tanh %26 : vector<32x128xf32>
    %c0_8 = arith.constant 0 : index
    %c0_9 = arith.constant 0 : index
    %28 = vector.load %arg5[%c0_8, %c0_9] : memref<3x32xf32, #tpu.memory_space<vmem>>, vector<3x32xf32>
    %cst = arith.constant dense<0.000000e+00> : vector<3x128xf32>
    %29 = tpu.matmul %28, %27, %cst {dimension_numbers = #tpu.dot_dimension_numbers<[1], [0], [0], [1], [0, 0, 1, 1], [], []>} : vector<3x32xf32>, vector<32x128xf32>, vector<3x128xf32> -> vector<3x128xf32>
    %c0_10 = arith.constant 0 : index
    %c0_11 = arith.constant 0 : index
    %30 = vector.load %arg6[%c0_10, %c0_11] : memref<3x1xf32, #tpu.memory_space<vmem>>, vector<3x1xf32>
    %31 = vector.broadcast %30 : vector<3x1xf32> to vector<3x128xf32>
    %32 = arith.addf %29, %31 : vector<3x128xf32>
    %33 = vector.extract_strided_slice %32 {offsets = [0, 0], sizes = [1, 128], strides = [1, 1]} : vector<3x128xf32> to vector<1x128xf32>
    %34 = vector.extract_strided_slice %32 {offsets = [1, 0], sizes = [1, 128], strides = [1, 1]} : vector<3x128xf32> to vector<1x128xf32>
    %35 = vector.extract_strided_slice %32 {offsets = [2, 0], sizes = [1, 128], strides = [1, 1]} : vector<3x128xf32> to vector<1x128xf32>
    %36 = arith.maximumf %33, %34 : vector<1x128xf32>
    %37 = arith.maximumf %36, %35 : vector<1x128xf32>
    %38 = arith.subf %33, %37 : vector<1x128xf32>
    %39 = math.exp %38 : vector<1x128xf32>
    %40 = arith.subf %34, %37 : vector<1x128xf32>
    %41 = math.exp %40 : vector<1x128xf32>
    %42 = arith.subf %35, %37 : vector<1x128xf32>
    %43 = math.exp %42 : vector<1x128xf32>
    %44 = arith.addf %39, %41 : vector<1x128xf32>
    %45 = arith.addf %44, %43 : vector<1x128xf32>
    %cst_12 = arith.constant 1.000000e+00 : f32
    %46 = vector.broadcast %cst_12 : f32 to vector<1x128xf32>
    %47 = arith.divf %46, %45 : vector<1x128xf32>
    %48 = arith.mulf %39, %47 : vector<1x128xf32>
    %49 = arith.mulf %41, %47 : vector<1x128xf32>
    %50 = arith.mulf %43, %47 : vector<1x128xf32>
    %c0_13 = arith.constant 0 : index
    %c0_14 = arith.constant 0 : index
    %51 = vector.load %arg7[%c0_13, %c0_14] : memref<16x3xf32, #tpu.memory_space<vmem>>, vector<16x3xf32>
    %52 = vector.extract_strided_slice %51 {offsets = [0, 0], sizes = [1, 1], strides = [1, 1]} : vector<16x3xf32> to vector<1x1xf32>
    %53 = vector.broadcast %52 : vector<1x1xf32> to vector<1x128xf32>
    %54 = arith.mulf %53, %48 : vector<1x128xf32>
    %55 = vector.extract_strided_slice %51 {offsets = [0, 1], sizes = [1, 1], strides = [1, 1]} : vector<16x3xf32> to vector<1x1xf32>
    %56 = vector.broadcast %55 : vector<1x1xf32> to vector<1x128xf32>
    %57 = arith.mulf %56, %49 : vector<1x128xf32>
    %58 = arith.addf %54, %57 : vector<1x128xf32>
    %59 = vector.extract_strided_slice %51 {offsets = [0, 2], sizes = [1, 1], strides = [1, 1]} : vector<16x3xf32> to vector<1x1xf32>
    %60 = vector.broadcast %59 : vector<1x1xf32> to vector<1x128xf32>
    %61 = arith.mulf %60, %50 : vector<1x128xf32>
    %62 = arith.addf %58, %61 : vector<1x128xf32>
    %63 = vector.extract_strided_slice %51 {offsets = [1, 0], sizes = [1, 1], strides = [1, 1]} : vector<16x3xf32> to vector<1x1xf32>
    %64 = vector.broadcast %63 : vector<1x1xf32> to vector<1x128xf32>
    %65 = arith.mulf %64, %48 : vector<1x128xf32>
    %66 = vector.extract_strided_slice %51 {offsets = [1, 1], sizes = [1, 1], strides = [1, 1]} : vector<16x3xf32> to vector<1x1xf32>
    %67 = vector.broadcast %66 : vector<1x1xf32> to vector<1x128xf32>
    %68 = arith.mulf %67, %49 : vector<1x128xf32>
    %69 = arith.addf %65, %68 : vector<1x128xf32>
    %70 = vector.extract_strided_slice %51 {offsets = [1, 2], sizes = [1, 1], strides = [1, 1]} : vector<16x3xf32> to vector<1x1xf32>
    %71 = vector.broadcast %70 : vector<1x1xf32> to vector<1x128xf32>
    %72 = arith.mulf %71, %50 : vector<1x128xf32>
    %73 = arith.addf %69, %72 : vector<1x128xf32>
    %74 = vector.extract_strided_slice %51 {offsets = [2, 0], sizes = [1, 1], strides = [1, 1]} : vector<16x3xf32> to vector<1x1xf32>
    %75 = vector.broadcast %74 : vector<1x1xf32> to vector<1x128xf32>
    %76 = arith.mulf %75, %48 : vector<1x128xf32>
    %77 = vector.extract_strided_slice %51 {offsets = [2, 1], sizes = [1, 1], strides = [1, 1]} : vector<16x3xf32> to vector<1x1xf32>
    %78 = vector.broadcast %77 : vector<1x1xf32> to vector<1x128xf32>
    %79 = arith.mulf %78, %49 : vector<1x128xf32>
    %80 = arith.addf %76, %79 : vector<1x128xf32>
    %81 = vector.extract_strided_slice %51 {offsets = [2, 2], sizes = [1, 1], strides = [1, 1]} : vector<16x3xf32> to vector<1x1xf32>
    %82 = vector.broadcast %81 : vector<1x1xf32> to vector<1x128xf32>
    %83 = arith.mulf %82, %50 : vector<1x128xf32>
    %84 = arith.addf %80, %83 : vector<1x128xf32>
    %85 = vector.extract_strided_slice %51 {offsets = [3, 0], sizes = [1, 1], strides = [1, 1]} : vector<16x3xf32> to vector<1x1xf32>
    %86 = vector.broadcast %85 : vector<1x1xf32> to vector<1x128xf32>
    %87 = arith.mulf %86, %48 : vector<1x128xf32>
    %88 = vector.extract_strided_slice %51 {offsets = [3, 1], sizes = [1, 1], strides = [1, 1]} : vector<16x3xf32> to vector<1x1xf32>
    %89 = vector.broadcast %88 : vector<1x1xf32> to vector<1x128xf32>
    %90 = arith.mulf %89, %49 : vector<1x128xf32>
    %91 = arith.addf %87, %90 : vector<1x128xf32>
    %92 = vector.extract_strided_slice %51 {offsets = [3, 2], sizes = [1, 1], strides = [1, 1]} : vector<16x3xf32> to vector<1x1xf32>
    %93 = vector.broadcast %92 : vector<1x1xf32> to vector<1x128xf32>
    %94 = arith.mulf %93, %50 : vector<1x128xf32>
    %95 = arith.addf %91, %94 : vector<1x128xf32>
    %96 = vector.extract_strided_slice %51 {offsets = [4, 0], sizes = [1, 1], strides = [1, 1]} : vector<16x3xf32> to vector<1x1xf32>
    %97 = vector.broadcast %96 : vector<1x1xf32> to vector<1x128xf32>
    %98 = arith.mulf %97, %48 : vector<1x128xf32>
    %99 = vector.extract_strided_slice %51 {offsets = [4, 1], sizes = [1, 1], strides = [1, 1]} : vector<16x3xf32> to vector<1x1xf32>
    %100 = vector.broadcast %99 : vector<1x1xf32> to vector<1x128xf32>
    %101 = arith.mulf %100, %49 : vector<1x128xf32>
    %102 = arith.addf %98, %101 : vector<1x128xf32>
    %103 = vector.extract_strided_slice %51 {offsets = [4, 2], sizes = [1, 1], strides = [1, 1]} : vector<16x3xf32> to vector<1x1xf32>
    %104 = vector.broadcast %103 : vector<1x1xf32> to vector<1x128xf32>
    %105 = arith.mulf %104, %50 : vector<1x128xf32>
    %106 = arith.addf %102, %105 : vector<1x128xf32>
    %107 = vector.extract_strided_slice %51 {offsets = [5, 0], sizes = [1, 1], strides = [1, 1]} : vector<16x3xf32> to vector<1x1xf32>
    %108 = vector.broadcast %107 : vector<1x1xf32> to vector<1x128xf32>
    %109 = arith.mulf %108, %48 : vector<1x128xf32>
    %110 = vector.extract_strided_slice %51 {offsets = [5, 1], sizes = [1, 1], strides = [1, 1]} : vector<16x3xf32> to vector<1x1xf32>
    %111 = vector.broadcast %110 : vector<1x1xf32> to vector<1x128xf32>
    %112 = arith.mulf %111, %49 : vector<1x128xf32>
    %113 = arith.addf %109, %112 : vector<1x128xf32>
    %114 = vector.extract_strided_slice %51 {offsets = [5, 2], sizes = [1, 1], strides = [1, 1]} : vector<16x3xf32> to vector<1x1xf32>
    %115 = vector.broadcast %114 : vector<1x1xf32> to vector<1x128xf32>
    %116 = arith.mulf %115, %50 : vector<1x128xf32>
    %117 = arith.addf %113, %116 : vector<1x128xf32>
    %118 = vector.extract_strided_slice %51 {offsets = [6, 0], sizes = [1, 1], strides = [1, 1]} : vector<16x3xf32> to vector<1x1xf32>
    %119 = vector.broadcast %118 : vector<1x1xf32> to vector<1x128xf32>
    %120 = arith.mulf %119, %48 : vector<1x128xf32>
    %121 = vector.extract_strided_slice %51 {offsets = [6, 1], sizes = [1, 1], strides = [1, 1]} : vector<16x3xf32> to vector<1x1xf32>
    %122 = vector.broadcast %121 : vector<1x1xf32> to vector<1x128xf32>
    %123 = arith.mulf %122, %49 : vector<1x128xf32>
    %124 = arith.addf %120, %123 : vector<1x128xf32>
    %125 = vector.extract_strided_slice %51 {offsets = [6, 2], sizes = [1, 1], strides = [1, 1]} : vector<16x3xf32> to vector<1x1xf32>
    %126 = vector.broadcast %125 : vector<1x1xf32> to vector<1x128xf32>
    %127 = arith.mulf %126, %50 : vector<1x128xf32>
    %128 = arith.addf %124, %127 : vector<1x128xf32>
    %129 = vector.extract_strided_slice %51 {offsets = [7, 0], sizes = [1, 1], strides = [1, 1]} : vector<16x3xf32> to vector<1x1xf32>
    %130 = vector.broadcast %129 : vector<1x1xf32> to vector<1x128xf32>
    %131 = arith.mulf %130, %48 : vector<1x128xf32>
    %132 = vector.extract_strided_slice %51 {offsets = [7, 1], sizes = [1, 1], strides = [1, 1]} : vector<16x3xf32> to vector<1x1xf32>
    %133 = vector.broadcast %132 : vector<1x1xf32> to vector<1x128xf32>
    %134 = arith.mulf %133, %49 : vector<1x128xf32>
    %135 = arith.addf %131, %134 : vector<1x128xf32>
    %136 = vector.extract_strided_slice %51 {offsets = [7, 2], sizes = [1, 1], strides = [1, 1]} : vector<16x3xf32> to vector<1x1xf32>
    %137 = vector.broadcast %136 : vector<1x1xf32> to vector<1x128xf32>
    %138 = arith.mulf %137, %50 : vector<1x128xf32>
    %139 = arith.addf %135, %138 : vector<1x128xf32>
    %140 = vector.extract_strided_slice %51 {offsets = [8, 0], sizes = [1, 1], strides = [1, 1]} : vector<16x3xf32> to vector<1x1xf32>
    %141 = vector.broadcast %140 : vector<1x1xf32> to vector<1x128xf32>
    %142 = arith.mulf %141, %48 : vector<1x128xf32>
    %143 = vector.extract_strided_slice %51 {offsets = [8, 1], sizes = [1, 1], strides = [1, 1]} : vector<16x3xf32> to vector<1x1xf32>
    %144 = vector.broadcast %143 : vector<1x1xf32> to vector<1x128xf32>
    %145 = arith.mulf %144, %49 : vector<1x128xf32>
    %146 = arith.addf %142, %145 : vector<1x128xf32>
    %147 = vector.extract_strided_slice %51 {offsets = [8, 2], sizes = [1, 1], strides = [1, 1]} : vector<16x3xf32> to vector<1x1xf32>
    %148 = vector.broadcast %147 : vector<1x1xf32> to vector<1x128xf32>
    %149 = arith.mulf %148, %50 : vector<1x128xf32>
    %150 = arith.addf %146, %149 : vector<1x128xf32>
    %151 = vector.extract_strided_slice %51 {offsets = [9, 0], sizes = [1, 1], strides = [1, 1]} : vector<16x3xf32> to vector<1x1xf32>
    %152 = vector.broadcast %151 : vector<1x1xf32> to vector<1x128xf32>
    %153 = arith.mulf %152, %48 : vector<1x128xf32>
    %154 = vector.extract_strided_slice %51 {offsets = [9, 1], sizes = [1, 1], strides = [1, 1]} : vector<16x3xf32> to vector<1x1xf32>
    %155 = vector.broadcast %154 : vector<1x1xf32> to vector<1x128xf32>
    %156 = arith.mulf %155, %49 : vector<1x128xf32>
    %157 = arith.addf %153, %156 : vector<1x128xf32>
    %158 = vector.extract_strided_slice %51 {offsets = [9, 2], sizes = [1, 1], strides = [1, 1]} : vector<16x3xf32> to vector<1x1xf32>
    %159 = vector.broadcast %158 : vector<1x1xf32> to vector<1x128xf32>
    %160 = arith.mulf %159, %50 : vector<1x128xf32>
    %161 = arith.addf %157, %160 : vector<1x128xf32>
    %162 = vector.extract_strided_slice %51 {offsets = [10, 0], sizes = [1, 1], strides = [1, 1]} : vector<16x3xf32> to vector<1x1xf32>
    %163 = vector.broadcast %162 : vector<1x1xf32> to vector<1x128xf32>
    %164 = arith.mulf %163, %48 : vector<1x128xf32>
    %165 = vector.extract_strided_slice %51 {offsets = [10, 1], sizes = [1, 1], strides = [1, 1]} : vector<16x3xf32> to vector<1x1xf32>
    %166 = vector.broadcast %165 : vector<1x1xf32> to vector<1x128xf32>
    %167 = arith.mulf %166, %49 : vector<1x128xf32>
    %168 = arith.addf %164, %167 : vector<1x128xf32>
    %169 = vector.extract_strided_slice %51 {offsets = [10, 2], sizes = [1, 1], strides = [1, 1]} : vector<16x3xf32> to vector<1x1xf32>
    %170 = vector.broadcast %169 : vector<1x1xf32> to vector<1x128xf32>
    %171 = arith.mulf %170, %50 : vector<1x128xf32>
    %172 = arith.addf %168, %171 : vector<1x128xf32>
    %173 = vector.extract_strided_slice %51 {offsets = [11, 0], sizes = [1, 1], strides = [1, 1]} : vector<16x3xf32> to vector<1x1xf32>
    %174 = vector.broadcast %173 : vector<1x1xf32> to vector<1x128xf32>
    %175 = arith.mulf %174, %48 : vector<1x128xf32>
    %176 = vector.extract_strided_slice %51 {offsets = [11, 1], sizes = [1, 1], strides = [1, 1]} : vector<16x3xf32> to vector<1x1xf32>
    %177 = vector.broadcast %176 : vector<1x1xf32> to vector<1x128xf32>
    %178 = arith.mulf %177, %49 : vector<1x128xf32>
    %179 = arith.addf %175, %178 : vector<1x128xf32>
    %180 = vector.extract_strided_slice %51 {offsets = [11, 2], sizes = [1, 1], strides = [1, 1]} : vector<16x3xf32> to vector<1x1xf32>
    %181 = vector.broadcast %180 : vector<1x1xf32> to vector<1x128xf32>
    %182 = arith.mulf %181, %50 : vector<1x128xf32>
    %183 = arith.addf %179, %182 : vector<1x128xf32>
    %184 = vector.extract_strided_slice %51 {offsets = [12, 0], sizes = [1, 1], strides = [1, 1]} : vector<16x3xf32> to vector<1x1xf32>
    %185 = vector.broadcast %184 : vector<1x1xf32> to vector<1x128xf32>
    %186 = arith.mulf %185, %48 : vector<1x128xf32>
    %187 = vector.extract_strided_slice %51 {offsets = [12, 1], sizes = [1, 1], strides = [1, 1]} : vector<16x3xf32> to vector<1x1xf32>
    %188 = vector.broadcast %187 : vector<1x1xf32> to vector<1x128xf32>
    %189 = arith.mulf %188, %49 : vector<1x128xf32>
    %190 = arith.addf %186, %189 : vector<1x128xf32>
    %191 = vector.extract_strided_slice %51 {offsets = [12, 2], sizes = [1, 1], strides = [1, 1]} : vector<16x3xf32> to vector<1x1xf32>
    %192 = vector.broadcast %191 : vector<1x1xf32> to vector<1x128xf32>
    %193 = arith.mulf %192, %50 : vector<1x128xf32>
    %194 = arith.addf %190, %193 : vector<1x128xf32>
    %195 = vector.extract_strided_slice %51 {offsets = [13, 0], sizes = [1, 1], strides = [1, 1]} : vector<16x3xf32> to vector<1x1xf32>
    %196 = vector.broadcast %195 : vector<1x1xf32> to vector<1x128xf32>
    %197 = arith.mulf %196, %48 : vector<1x128xf32>
    %198 = vector.extract_strided_slice %51 {offsets = [13, 1], sizes = [1, 1], strides = [1, 1]} : vector<16x3xf32> to vector<1x1xf32>
    %199 = vector.broadcast %198 : vector<1x1xf32> to vector<1x128xf32>
    %200 = arith.mulf %199, %49 : vector<1x128xf32>
    %201 = arith.addf %197, %200 : vector<1x128xf32>
    %202 = vector.extract_strided_slice %51 {offsets = [13, 2], sizes = [1, 1], strides = [1, 1]} : vector<16x3xf32> to vector<1x1xf32>
    %203 = vector.broadcast %202 : vector<1x1xf32> to vector<1x128xf32>
    %204 = arith.mulf %203, %50 : vector<1x128xf32>
    %205 = arith.addf %201, %204 : vector<1x128xf32>
    %206 = vector.extract_strided_slice %51 {offsets = [14, 0], sizes = [1, 1], strides = [1, 1]} : vector<16x3xf32> to vector<1x1xf32>
    %207 = vector.broadcast %206 : vector<1x1xf32> to vector<1x128xf32>
    %208 = arith.mulf %207, %48 : vector<1x128xf32>
    %209 = vector.extract_strided_slice %51 {offsets = [14, 1], sizes = [1, 1], strides = [1, 1]} : vector<16x3xf32> to vector<1x1xf32>
    %210 = vector.broadcast %209 : vector<1x1xf32> to vector<1x128xf32>
    %211 = arith.mulf %210, %49 : vector<1x128xf32>
    %212 = arith.addf %208, %211 : vector<1x128xf32>
    %213 = vector.extract_strided_slice %51 {offsets = [14, 2], sizes = [1, 1], strides = [1, 1]} : vector<16x3xf32> to vector<1x1xf32>
    %214 = vector.broadcast %213 : vector<1x1xf32> to vector<1x128xf32>
    %215 = arith.mulf %214, %50 : vector<1x128xf32>
    %216 = arith.addf %212, %215 : vector<1x128xf32>
    %217 = vector.extract_strided_slice %51 {offsets = [15, 0], sizes = [1, 1], strides = [1, 1]} : vector<16x3xf32> to vector<1x1xf32>
    %218 = vector.broadcast %217 : vector<1x1xf32> to vector<1x128xf32>
    %219 = arith.mulf %218, %48 : vector<1x128xf32>
    %220 = vector.extract_strided_slice %51 {offsets = [15, 1], sizes = [1, 1], strides = [1, 1]} : vector<16x3xf32> to vector<1x1xf32>
    %221 = vector.broadcast %220 : vector<1x1xf32> to vector<1x128xf32>
    %222 = arith.mulf %221, %49 : vector<1x128xf32>
    %223 = arith.addf %219, %222 : vector<1x128xf32>
    %224 = vector.extract_strided_slice %51 {offsets = [15, 2], sizes = [1, 1], strides = [1, 1]} : vector<16x3xf32> to vector<1x1xf32>
    %225 = vector.broadcast %224 : vector<1x1xf32> to vector<1x128xf32>
    %226 = arith.mulf %225, %50 : vector<1x128xf32>
    %227 = arith.addf %223, %226 : vector<1x128xf32>
    %228 = arith.mulf %62, %0 : vector<1x128xf32>
    %229 = arith.mulf %73, %1 : vector<1x128xf32>
    %230 = arith.addf %228, %229 : vector<1x128xf32>
    %231 = arith.mulf %84, %2 : vector<1x128xf32>
    %232 = arith.addf %230, %231 : vector<1x128xf32>
    %233 = arith.mulf %95, %3 : vector<1x128xf32>
    %234 = arith.addf %232, %233 : vector<1x128xf32>
    %235 = arith.mulf %106, %0 : vector<1x128xf32>
    %236 = arith.mulf %117, %1 : vector<1x128xf32>
    %237 = arith.addf %235, %236 : vector<1x128xf32>
    %238 = arith.mulf %128, %2 : vector<1x128xf32>
    %239 = arith.addf %237, %238 : vector<1x128xf32>
    %240 = arith.mulf %139, %3 : vector<1x128xf32>
    %241 = arith.addf %239, %240 : vector<1x128xf32>
    %242 = arith.mulf %150, %0 : vector<1x128xf32>
    %243 = arith.mulf %161, %1 : vector<1x128xf32>
    %244 = arith.addf %242, %243 : vector<1x128xf32>
    %245 = arith.mulf %172, %2 : vector<1x128xf32>
    %246 = arith.addf %244, %245 : vector<1x128xf32>
    %247 = arith.mulf %183, %3 : vector<1x128xf32>
    %248 = arith.addf %246, %247 : vector<1x128xf32>
    %249 = arith.mulf %194, %0 : vector<1x128xf32>
    %250 = arith.mulf %205, %1 : vector<1x128xf32>
    %251 = arith.addf %249, %250 : vector<1x128xf32>
    %252 = arith.mulf %216, %2 : vector<1x128xf32>
    %253 = arith.addf %251, %252 : vector<1x128xf32>
    %254 = arith.mulf %227, %3 : vector<1x128xf32>
    %255 = arith.addf %253, %254 : vector<1x128xf32>
    %256 = tpu.concatenate %234, %241, %248, %255 in 0 : vector<1x128xf32>, vector<1x128xf32>, vector<1x128xf32>, vector<1x128xf32> -> vector<4x128xf32>
    %c0_15 = arith.constant 0 : index
    %c0_16 = arith.constant 0 : index
    %257 = vector.load %arg9[%c0_15, %c0_16] : memref<4x128xf32, #tpu.memory_space<vmem>>, vector<4x128xf32>
    tpu.vector_store %arg9[%c0_15, %c0_16], %256 {strides = array<i32>} : memref<4x128xf32, #tpu.memory_space<vmem>>, vector<4x128xf32>,
    %c0_17 = arith.constant 0 : index
    %c0_18 = arith.constant 0 : index
    %258 = vector.load %arg8[%c0_17, %c0_18] : memref<1x4xf32, #tpu.memory_space<vmem>>, vector<1x4xf32>
    %c0_19 = arith.constant 0 : index
    %c0_20 = arith.constant 0 : index
    %259 = vector.load %arg2[%c0_19, %c0_20] : memref<16x128xf32, #tpu.memory_space<vmem>>, vector<1x128xf32>
    %260 = arith.mulf %62, %259 : vector<1x128xf32>
    %c4 = arith.constant 4 : index
    %c0_21 = arith.constant 0 : index
    %261 = vector.load %arg2[%c4, %c0_21] : memref<16x128xf32, #tpu.memory_space<vmem>>, vector<1x128xf32>
    %262 = arith.mulf %73, %261 : vector<1x128xf32>
    %263 = arith.addf %260, %262 : vector<1x128xf32>
    %c8 = arith.constant 8 : index
    %c0_22 = arith.constant 0 : index
    %264 = vector.load %arg2[%c8, %c0_22] : memref<16x128xf32, #tpu.memory_space<vmem>>, vector<1x128xf32>
    %265 = arith.mulf %84, %264 : vector<1x128xf32>
    %266 = arith.addf %263, %265 : vector<1x128xf32>
    %c12 = arith.constant 12 : index
    %c0_23 = arith.constant 0 : index
    %267 = vector.load %arg2[%c12, %c0_23] : memref<16x128xf32, #tpu.memory_space<vmem>>, vector<1x128xf32>
    %268 = arith.mulf %95, %267 : vector<1x128xf32>
    %269 = arith.addf %266, %268 : vector<1x128xf32>
    %270 = arith.addf %269, %269 : vector<1x128xf32>
    %271 = vector.extract_strided_slice %258 {offsets = [0, 0], sizes = [1, 1], strides = [1, 1]} : vector<1x4xf32> to vector<1x1xf32>
    %272 = vector.broadcast %271 : vector<1x1xf32> to vector<1x128xf32>
    %273 = arith.addf %270, %272 : vector<1x128xf32>
    %c1_24 = arith.constant 1 : index
    %c0_25 = arith.constant 0 : index
    %274 = vector.load %arg2[%c1_24, %c0_25] : memref<16x128xf32, #tpu.memory_space<vmem>>, vector<1x128xf32>
    %275 = arith.mulf %62, %274 : vector<1x128xf32>
    %c5 = arith.constant 5 : index
    %c0_26 = arith.constant 0 : index
    %276 = vector.load %arg2[%c5, %c0_26] : memref<16x128xf32, #tpu.memory_space<vmem>>, vector<1x128xf32>
    %277 = arith.mulf %73, %276 : vector<1x128xf32>
    %278 = arith.addf %275, %277 : vector<1x128xf32>
    %c9 = arith.constant 9 : index
    %c0_27 = arith.constant 0 : index
    %279 = vector.load %arg2[%c9, %c0_27] : memref<16x128xf32, #tpu.memory_space<vmem>>, vector<1x128xf32>
    %280 = arith.mulf %84, %279 : vector<1x128xf32>
    %281 = arith.addf %278, %280 : vector<1x128xf32>
    %c13 = arith.constant 13 : index
    %c0_28 = arith.constant 0 : index
    %282 = vector.load %arg2[%c13, %c0_28] : memref<16x128xf32, #tpu.memory_space<vmem>>, vector<1x128xf32>
    %283 = arith.mulf %95, %282 : vector<1x128xf32>
    %284 = arith.addf %281, %283 : vector<1x128xf32>
    %c0_29 = arith.constant 0 : index
    %c0_30 = arith.constant 0 : index
    %285 = vector.load %arg2[%c0_29, %c0_30] : memref<16x128xf32, #tpu.memory_space<vmem>>, vector<1x128xf32>
    %286 = arith.mulf %106, %285 : vector<1x128xf32>
    %c4_31 = arith.constant 4 : index
    %c0_32 = arith.constant 0 : index
    %287 = vector.load %arg2[%c4_31, %c0_32] : memref<16x128xf32, #tpu.memory_space<vmem>>, vector<1x128xf32>
    %288 = arith.mulf %117, %287 : vector<1x128xf32>
    %289 = arith.addf %286, %288 : vector<1x128xf32>
    %c8_33 = arith.constant 8 : index
    %c0_34 = arith.constant 0 : index
    %290 = vector.load %arg2[%c8_33, %c0_34] : memref<16x128xf32, #tpu.memory_space<vmem>>, vector<1x128xf32>
    %291 = arith.mulf %128, %290 : vector<1x128xf32>
    %292 = arith.addf %289, %291 : vector<1x128xf32>
    %c12_35 = arith.constant 12 : index
    %c0_36 = arith.constant 0 : index
    %293 = vector.load %arg2[%c12_35, %c0_36] : memref<16x128xf32, #tpu.memory_space<vmem>>, vector<1x128xf32>
    %294 = arith.mulf %139, %293 : vector<1x128xf32>
    %295 = arith.addf %292, %294 : vector<1x128xf32>
    %296 = arith.addf %284, %295 : vector<1x128xf32>
    %c2_37 = arith.constant 2 : index
    %c0_38 = arith.constant 0 : index
    %297 = vector.load %arg2[%c2_37, %c0_38] : memref<16x128xf32, #tpu.memory_space<vmem>>, vector<1x128xf32>
    %298 = arith.mulf %62, %297 : vector<1x128xf32>
    %c6 = arith.constant 6 : index
    %c0_39 = arith.constant 0 : index
    %299 = vector.load %arg2[%c6, %c0_39] : memref<16x128xf32, #tpu.memory_space<vmem>>, vector<1x128xf32>
    %300 = arith.mulf %73, %299 : vector<1x128xf32>
    %301 = arith.addf %298, %300 : vector<1x128xf32>
    %c10 = arith.constant 10 : index
    %c0_40 = arith.constant 0 : index
    %302 = vector.load %arg2[%c10, %c0_40] : memref<16x128xf32, #tpu.memory_space<vmem>>, vector<1x128xf32>
    %303 = arith.mulf %84, %302 : vector<1x128xf32>
    %304 = arith.addf %301, %303 : vector<1x128xf32>
    %c14 = arith.constant 14 : index
    %c0_41 = arith.constant 0 : index
    %305 = vector.load %arg2[%c14, %c0_41] : memref<16x128xf32, #tpu.memory_space<vmem>>, vector<1x128xf32>
    %306 = arith.mulf %95, %305 : vector<1x128xf32>
    %307 = arith.addf %304, %306 : vector<1x128xf32>
    %c0_42 = arith.constant 0 : index
    %c0_43 = arith.constant 0 : index
    %308 = vector.load %arg2[%c0_42, %c0_43] : memref<16x128xf32, #tpu.memory_space<vmem>>, vector<1x128xf32>
    %309 = arith.mulf %150, %308 : vector<1x128xf32>
    %c4_44 = arith.constant 4 : index
    %c0_45 = arith.constant 0 : index
    %310 = vector.load %arg2[%c4_44, %c0_45] : memref<16x128xf32, #tpu.memory_space<vmem>>, vector<1x128xf32>
    %311 = arith.mulf %161, %310 : vector<1x128xf32>
    %312 = arith.addf %309, %311 : vector<1x128xf32>
    %c8_46 = arith.constant 8 : index
    %c0_47 = arith.constant 0 : index
    %313 = vector.load %arg2[%c8_46, %c0_47] : memref<16x128xf32, #tpu.memory_space<vmem>>, vector<1x128xf32>
    %314 = arith.mulf %172, %313 : vector<1x128xf32>
    %315 = arith.addf %312, %314 : vector<1x128xf32>
    %c12_48 = arith.constant 12 : index
    %c0_49 = arith.constant 0 : index
    %316 = vector.load %arg2[%c12_48, %c0_49] : memref<16x128xf32, #tpu.memory_space<vmem>>, vector<1x128xf32>
    %317 = arith.mulf %183, %316 : vector<1x128xf32>
    %318 = arith.addf %315, %317 : vector<1x128xf32>
    %319 = arith.addf %307, %318 : vector<1x128xf32>
    %c3_50 = arith.constant 3 : index
    %c0_51 = arith.constant 0 : index
    %320 = vector.load %arg2[%c3_50, %c0_51] : memref<16x128xf32, #tpu.memory_space<vmem>>, vector<1x128xf32>
    %321 = arith.mulf %62, %320 : vector<1x128xf32>
    %c7 = arith.constant 7 : index
    %c0_52 = arith.constant 0 : index
    %322 = vector.load %arg2[%c7, %c0_52] : memref<16x128xf32, #tpu.memory_space<vmem>>, vector<1x128xf32>
    %323 = arith.mulf %73, %322 : vector<1x128xf32>
    %324 = arith.addf %321, %323 : vector<1x128xf32>
    %c11 = arith.constant 11 : index
    %c0_53 = arith.constant 0 : index
    %325 = vector.load %arg2[%c11, %c0_53] : memref<16x128xf32, #tpu.memory_space<vmem>>, vector<1x128xf32>
    %326 = arith.mulf %84, %325 : vector<1x128xf32>
    %327 = arith.addf %324, %326 : vector<1x128xf32>
    %c15 = arith.constant 15 : index
    %c0_54 = arith.constant 0 : index
    %328 = vector.load %arg2[%c15, %c0_54] : memref<16x128xf32, #tpu.memory_space<vmem>>, vector<1x128xf32>
    %329 = arith.mulf %95, %328 : vector<1x128xf32>
    %330 = arith.addf %327, %329 : vector<1x128xf32>
    %c0_55 = arith.constant 0 : index
    %c0_56 = arith.constant 0 : index
    %331 = vector.load %arg2[%c0_55, %c0_56] : memref<16x128xf32, #tpu.memory_space<vmem>>, vector<1x128xf32>
    %332 = arith.mulf %194, %331 : vector<1x128xf32>
    %c4_57 = arith.constant 4 : index
    %c0_58 = arith.constant 0 : index
    %333 = vector.load %arg2[%c4_57, %c0_58] : memref<16x128xf32, #tpu.memory_space<vmem>>, vector<1x128xf32>
    %334 = arith.mulf %205, %333 : vector<1x128xf32>
    %335 = arith.addf %332, %334 : vector<1x128xf32>
    %c8_59 = arith.constant 8 : index
    %c0_60 = arith.constant 0 : index
    %336 = vector.load %arg2[%c8_59, %c0_60] : memref<16x128xf32, #tpu.memory_space<vmem>>, vector<1x128xf32>
    %337 = arith.mulf %216, %336 : vector<1x128xf32>
    %338 = arith.addf %335, %337 : vector<1x128xf32>
    %c12_61 = arith.constant 12 : index
    %c0_62 = arith.constant 0 : index
    %339 = vector.load %arg2[%c12_61, %c0_62] : memref<16x128xf32, #tpu.memory_space<vmem>>, vector<1x128xf32>
    %340 = arith.mulf %227, %339 : vector<1x128xf32>
    %341 = arith.addf %338, %340 : vector<1x128xf32>
    %342 = arith.addf %330, %341 : vector<1x128xf32>
    %c1_63 = arith.constant 1 : index
    %c0_64 = arith.constant 0 : index
    %343 = vector.load %arg2[%c1_63, %c0_64] : memref<16x128xf32, #tpu.memory_space<vmem>>, vector<1x128xf32>
    %344 = arith.mulf %106, %343 : vector<1x128xf32>
    %c5_65 = arith.constant 5 : index
    %c0_66 = arith.constant 0 : index
    %345 = vector.load %arg2[%c5_65, %c0_66] : memref<16x128xf32, #tpu.memory_space<vmem>>, vector<1x128xf32>
    %346 = arith.mulf %117, %345 : vector<1x128xf32>
    %347 = arith.addf %344, %346 : vector<1x128xf32>
    %c9_67 = arith.constant 9 : index
    %c0_68 = arith.constant 0 : index
    %348 = vector.load %arg2[%c9_67, %c0_68] : memref<16x128xf32, #tpu.memory_space<vmem>>, vector<1x128xf32>
    %349 = arith.mulf %128, %348 : vector<1x128xf32>
    %350 = arith.addf %347, %349 : vector<1x128xf32>
    %c13_69 = arith.constant 13 : index
    %c0_70 = arith.constant 0 : index
    %351 = vector.load %arg2[%c13_69, %c0_70] : memref<16x128xf32, #tpu.memory_space<vmem>>, vector<1x128xf32>
    %352 = arith.mulf %139, %351 : vector<1x128xf32>
    %353 = arith.addf %350, %352 : vector<1x128xf32>
    %354 = arith.addf %353, %353 : vector<1x128xf32>
    %355 = vector.extract_strided_slice %258 {offsets = [0, 1], sizes = [1, 1], strides = [1, 1]} : vector<1x4xf32> to vector<1x1xf32>
    %356 = vector.broadcast %355 : vector<1x1xf32> to vector<1x128xf32>
    %357 = arith.addf %354, %356 : vector<1x128xf32>
    %c2_71 = arith.constant 2 : index
    %c0_72 = arith.constant 0 : index
    %358 = vector.load %arg2[%c2_71, %c0_72] : memref<16x128xf32, #tpu.memory_space<vmem>>, vector<1x128xf32>
    %359 = arith.mulf %106, %358 : vector<1x128xf32>
    %c6_73 = arith.constant 6 : index
    %c0_74 = arith.constant 0 : index
    %360 = vector.load %arg2[%c6_73, %c0_74] : memref<16x128xf32, #tpu.memory_space<vmem>>, vector<1x128xf32>
    %361 = arith.mulf %117, %360 : vector<1x128xf32>
    %362 = arith.addf %359, %361 : vector<1x128xf32>
    %c10_75 = arith.constant 10 : index
    %c0_76 = arith.constant 0 : index
    %363 = vector.load %arg2[%c10_75, %c0_76] : memref<16x128xf32, #tpu.memory_space<vmem>>, vector<1x128xf32>
    %364 = arith.mulf %128, %363 : vector<1x128xf32>
    %365 = arith.addf %362, %364 : vector<1x128xf32>
    %c14_77 = arith.constant 14 : index
    %c0_78 = arith.constant 0 : index
    %366 = vector.load %arg2[%c14_77, %c0_78] : memref<16x128xf32, #tpu.memory_space<vmem>>, vector<1x128xf32>
    %367 = arith.mulf %139, %366 : vector<1x128xf32>
    %368 = arith.addf %365, %367 : vector<1x128xf32>
    %c1_79 = arith.constant 1 : index
    %c0_80 = arith.constant 0 : index
    %369 = vector.load %arg2[%c1_79, %c0_80] : memref<16x128xf32, #tpu.memory_space<vmem>>, vector<1x128xf32>
    %370 = arith.mulf %150, %369 : vector<1x128xf32>
    %c5_81 = arith.constant 5 : index
    %c0_82 = arith.constant 0 : index
    %371 = vector.load %arg2[%c5_81, %c0_82] : memref<16x128xf32, #tpu.memory_space<vmem>>, vector<1x128xf32>
    %372 = arith.mulf %161, %371 : vector<1x128xf32>
    %373 = arith.addf %370, %372 : vector<1x128xf32>
    %c9_83 = arith.constant 9 : index
    %c0_84 = arith.constant 0 : index
    %374 = vector.load %arg2[%c9_83, %c0_84] : memref<16x128xf32, #tpu.memory_space<vmem>>, vector<1x128xf32>
    %375 = arith.mulf %172, %374 : vector<1x128xf32>
    %376 = arith.addf %373, %375 : vector<1x128xf32>
    %c13_85 = arith.constant 13 : index
    %c0_86 = arith.constant 0 : index
    %377 = vector.load %arg2[%c13_85, %c0_86] : memref<16x128xf32, #tpu.memory_space<vmem>>, vector<1x128xf32>
    %378 = arith.mulf %183, %377 : vector<1x128xf32>
    %379 = arith.addf %376, %378 : vector<1x128xf32>
    %380 = arith.addf %368, %379 : vector<1x128xf32>
    %c3_87 = arith.constant 3 : index
    %c0_88 = arith.constant 0 : index
    %381 = vector.load %arg2[%c3_87, %c0_88] : memref<16x128xf32, #tpu.memory_space<vmem>>, vector<1x128xf32>
    %382 = arith.mulf %106, %381 : vector<1x128xf32>
    %c7_89 = arith.constant 7 : index
    %c0_90 = arith.constant 0 : index
    %383 = vector.load %arg2[%c7_89, %c0_90] : memref<16x128xf32, #tpu.memory_space<vmem>>, vector<1x128xf32>
    %384 = arith.mulf %117, %383 : vector<1x128xf32>
    %385 = arith.addf %382, %384 : vector<1x128xf32>
    %c11_91 = arith.constant 11 : index
    %c0_92 = arith.constant 0 : index
    %386 = vector.load %arg2[%c11_91, %c0_92] : memref<16x128xf32, #tpu.memory_space<vmem>>, vector<1x128xf32>
    %387 = arith.mulf %128, %386 : vector<1x128xf32>
    %388 = arith.addf %385, %387 : vector<1x128xf32>
    %c15_93 = arith.constant 15 : index
    %c0_94 = arith.constant 0 : index
    %389 = vector.load %arg2[%c15_93, %c0_94] : memref<16x128xf32, #tpu.memory_space<vmem>>, vector<1x128xf32>
    %390 = arith.mulf %139, %389 : vector<1x128xf32>
    %391 = arith.addf %388, %390 : vector<1x128xf32>
    %c1_95 = arith.constant 1 : index
    %c0_96 = arith.constant 0 : index
    %392 = vector.load %arg2[%c1_95, %c0_96] : memref<16x128xf32, #tpu.memory_space<vmem>>, vector<1x128xf32>
    %393 = arith.mulf %194, %392 : vector<1x128xf32>
    %c5_97 = arith.constant 5 : index
    %c0_98 = arith.constant 0 : index
    %394 = vector.load %arg2[%c5_97, %c0_98] : memref<16x128xf32, #tpu.memory_space<vmem>>, vector<1x128xf32>
    %395 = arith.mulf %205, %394 : vector<1x128xf32>
    %396 = arith.addf %393, %395 : vector<1x128xf32>
    %c9_99 = arith.constant 9 : index
    %c0_100 = arith.constant 0 : index
    %397 = vector.load %arg2[%c9_99, %c0_100] : memref<16x128xf32, #tpu.memory_space<vmem>>, vector<1x128xf32>
    %398 = arith.mulf %216, %397 : vector<1x128xf32>
    %399 = arith.addf %396, %398 : vector<1x128xf32>
    %c13_101 = arith.constant 13 : index
    %c0_102 = arith.constant 0 : index
    %400 = vector.load %arg2[%c13_101, %c0_102] : memref<16x128xf32, #tpu.memory_space<vmem>>, vector<1x128xf32>
    %401 = arith.mulf %227, %400 : vector<1x128xf32>
    %402 = arith.addf %399, %401 : vector<1x128xf32>
    %403 = arith.addf %391, %402 : vector<1x128xf32>
    %c2_103 = arith.constant 2 : index
    %c0_104 = arith.constant 0 : index
    %404 = vector.load %arg2[%c2_103, %c0_104] : memref<16x128xf32, #tpu.memory_space<vmem>>, vector<1x128xf32>
    %405 = arith.mulf %150, %404 : vector<1x128xf32>
    %c6_105 = arith.constant 6 : index
    %c0_106 = arith.constant 0 : index
    %406 = vector.load %arg2[%c6_105, %c0_106] : memref<16x128xf32, #tpu.memory_space<vmem>>, vector<1x128xf32>
    %407 = arith.mulf %161, %406 : vector<1x128xf32>
    %408 = arith.addf %405, %407 : vector<1x128xf32>
    %c10_107 = arith.constant 10 : index
    %c0_108 = arith.constant 0 : index
    %409 = vector.load %arg2[%c10_107, %c0_108] : memref<16x128xf32, #tpu.memory_space<vmem>>, vector<1x128xf32>
    %410 = arith.mulf %172, %409 : vector<1x128xf32>
    %411 = arith.addf %408, %410 : vector<1x128xf32>
    %c14_109 = arith.constant 14 : index
    %c0_110 = arith.constant 0 : index
    %412 = vector.load %arg2[%c14_109, %c0_110] : memref<16x128xf32, #tpu.memory_space<vmem>>, vector<1x128xf32>
    %413 = arith.mulf %183, %412 : vector<1x128xf32>
    %414 = arith.addf %411, %413 : vector<1x128xf32>
    %415 = arith.addf %414, %414 : vector<1x128xf32>
    %416 = vector.extract_strided_slice %258 {offsets = [0, 2], sizes = [1, 1], strides = [1, 1]} : vector<1x4xf32> to vector<1x1xf32>
    %417 = vector.broadcast %416 : vector<1x1xf32> to vector<1x128xf32>
    %418 = arith.addf %415, %417 : vector<1x128xf32>
    %c3_111 = arith.constant 3 : index
    %c0_112 = arith.constant 0 : index
    %419 = vector.load %arg2[%c3_111, %c0_112] : memref<16x128xf32, #tpu.memory_space<vmem>>, vector<1x128xf32>
    %420 = arith.mulf %150, %419 : vector<1x128xf32>
    %c7_113 = arith.constant 7 : index
    %c0_114 = arith.constant 0 : index
    %421 = vector.load %arg2[%c7_113, %c0_114] : memref<16x128xf32, #tpu.memory_space<vmem>>, vector<1x128xf32>
    %422 = arith.mulf %161, %421 : vector<1x128xf32>
    %423 = arith.addf %420, %422 : vector<1x128xf32>
    %c11_115 = arith.constant 11 : index
    %c0_116 = arith.constant 0 : index
    %424 = vector.load %arg2[%c11_115, %c0_116] : memref<16x128xf32, #tpu.memory_space<vmem>>, vector<1x128xf32>
    %425 = arith.mulf %172, %424 : vector<1x128xf32>
    %426 = arith.addf %423, %425 : vector<1x128xf32>
    %c15_117 = arith.constant 15 : index
    %c0_118 = arith.constant 0 : index
    %427 = vector.load %arg2[%c15_117, %c0_118] : memref<16x128xf32, #tpu.memory_space<vmem>>, vector<1x128xf32>
    %428 = arith.mulf %183, %427 : vector<1x128xf32>
    %429 = arith.addf %426, %428 : vector<1x128xf32>
    %c2_119 = arith.constant 2 : index
    %c0_120 = arith.constant 0 : index
    %430 = vector.load %arg2[%c2_119, %c0_120] : memref<16x128xf32, #tpu.memory_space<vmem>>, vector<1x128xf32>
    %431 = arith.mulf %194, %430 : vector<1x128xf32>
    %c6_121 = arith.constant 6 : index
    %c0_122 = arith.constant 0 : index
    %432 = vector.load %arg2[%c6_121, %c0_122] : memref<16x128xf32, #tpu.memory_space<vmem>>, vector<1x128xf32>
    %433 = arith.mulf %205, %432 : vector<1x128xf32>
    %434 = arith.addf %431, %433 : vector<1x128xf32>
    %c10_123 = arith.constant 10 : index
    %c0_124 = arith.constant 0 : index
    %435 = vector.load %arg2[%c10_123, %c0_124] : memref<16x128xf32, #tpu.memory_space<vmem>>, vector<1x128xf32>
    %436 = arith.mulf %216, %435 : vector<1x128xf32>
    %437 = arith.addf %434, %436 : vector<1x128xf32>
    %c14_125 = arith.constant 14 : index
    %c0_126 = arith.constant 0 : index
    %438 = vector.load %arg2[%c14_125, %c0_126] : memref<16x128xf32, #tpu.memory_space<vmem>>, vector<1x128xf32>
    %439 = arith.mulf %227, %438 : vector<1x128xf32>
    %440 = arith.addf %437, %439 : vector<1x128xf32>
    %441 = arith.addf %429, %440 : vector<1x128xf32>
    %c3_127 = arith.constant 3 : index
    %c0_128 = arith.constant 0 : index
    %442 = vector.load %arg2[%c3_127, %c0_128] : memref<16x128xf32, #tpu.memory_space<vmem>>, vector<1x128xf32>
    %443 = arith.mulf %194, %442 : vector<1x128xf32>
    %c7_129 = arith.constant 7 : index
    %c0_130 = arith.constant 0 : index
    %444 = vector.load %arg2[%c7_129, %c0_130] : memref<16x128xf32, #tpu.memory_space<vmem>>, vector<1x128xf32>
    %445 = arith.mulf %205, %444 : vector<1x128xf32>
    %446 = arith.addf %443, %445 : vector<1x128xf32>
    %c11_131 = arith.constant 11 : index
    %c0_132 = arith.constant 0 : index
    %447 = vector.load %arg2[%c11_131, %c0_132] : memref<16x128xf32, #tpu.memory_space<vmem>>, vector<1x128xf32>
    %448 = arith.mulf %216, %447 : vector<1x128xf32>
    %449 = arith.addf %446, %448 : vector<1x128xf32>
    %c15_133 = arith.constant 15 : index
    %c0_134 = arith.constant 0 : index
    %450 = vector.load %arg2[%c15_133, %c0_134] : memref<16x128xf32, #tpu.memory_space<vmem>>, vector<1x128xf32>
    %451 = arith.mulf %227, %450 : vector<1x128xf32>
    %452 = arith.addf %449, %451 : vector<1x128xf32>
    %453 = arith.addf %452, %452 : vector<1x128xf32>
    %454 = vector.extract_strided_slice %258 {offsets = [0, 3], sizes = [1, 1], strides = [1, 1]} : vector<1x4xf32> to vector<1x1xf32>
    %455 = vector.broadcast %454 : vector<1x1xf32> to vector<1x128xf32>
    %456 = arith.addf %453, %455 : vector<1x128xf32>
    %457 = tpu.concatenate %273, %296, %319, %342, %296, %357, %380, %403 in 0 : vector<1x128xf32>, vector<1x128xf32>, vector<1x128xf32>, vector<1x128xf32>, vector<1x128xf32>, vector<1x128xf32>, vector<1x128xf32>, vector<1x128xf32> -> vector<8x128xf32>
    %c0_135 = arith.constant 0 : index
    %c0_136 = arith.constant 0 : index
    %458 = vector.load %arg10[%c0_135, %c0_136] : memref<16x128xf32, #tpu.memory_space<vmem>>, vector<8x128xf32>
    tpu.vector_store %arg10[%c0_135, %c0_136], %457 {strides = array<i32>} : memref<16x128xf32, #tpu.memory_space<vmem>>, vector<8x128xf32>,
    %459 = tpu.concatenate %319, %380, %418, %441, %342, %403, %441, %456 in 0 : vector<1x128xf32>, vector<1x128xf32>, vector<1x128xf32>, vector<1x128xf32>, vector<1x128xf32>, vector<1x128xf32>, vector<1x128xf32>, vector<1x128xf32> -> vector<8x128xf32>
    %c8_137 = arith.constant 8 : index
    %c0_138 = arith.constant 0 : index
    %460 = vector.load %arg10[%c8_137, %c0_138] : memref<16x128xf32, #tpu.memory_space<vmem>>, vector<8x128xf32>
    tpu.vector_store %arg10[%c8_137, %c0_138], %459 {strides = array<i32>} : memref<16x128xf32, #tpu.memory_space<vmem>>, vector<8x128xf32>,
    return
  }
  func.func @transform_0(%arg0: i32) -> (i32, i32) {
    %c0_i32 = arith.constant 0 : i32
    %c0_i32_0 = arith.constant 0 : i32
    return %c0_i32, %arg0 : i32, i32
  }
  func.func @transform_1(%arg0: i32) -> (i32, i32) {
    %c0_i32 = arith.constant 0 : i32
    %c0_i32_0 = arith.constant 0 : i32
    return %c0_i32, %arg0 : i32, i32
  }
  func.func @transform_2(%arg0: i32) -> (i32, i32) {
    %c0_i32 = arith.constant 0 : i32
    %c0_i32_0 = arith.constant 0 : i32
    %c0_i32_1 = arith.constant 0 : i32
    return %c0_i32, %c0_i32_0 : i32, i32
  }
  func.func @transform_3(%arg0: i32) -> (i32, i32) {
    %c0_i32 = arith.constant 0 : i32
    %c0_i32_0 = arith.constant 0 : i32
    %c0_i32_1 = arith.constant 0 : i32
    return %c0_i32, %c0_i32_0 : i32, i32
  }
  func.func @transform_4(%arg0: i32) -> (i32, i32) {
    %c0_i32 = arith.constant 0 : i32
    %c0_i32_0 = arith.constant 0 : i32
    %c0_i32_1 = arith.constant 0 : i32
    return %c0_i32, %c0_i32_0 : i32, i32
  }
  func.func @transform_5(%arg0: i32) -> (i32, i32) {
    %c0_i32 = arith.constant 0 : i32
    %c0_i32_0 = arith.constant 0 : i32
    %c0_i32_1 = arith.constant 0 : i32
    return %c0_i32, %c0_i32_0 : i32, i32
  }
  func.func @transform_6(%arg0: i32) -> (i32, i32) {
    %c0_i32 = arith.constant 0 : i32
    %c0_i32_0 = arith.constant 0 : i32
    %c0_i32_1 = arith.constant 0 : i32
    return %c0_i32, %c0_i32_0 : i32, i32
  }
  func.func @transform_7(%arg0: i32) -> (i32, i32) {
    %c0_i32 = arith.constant 0 : i32
    %c0_i32_0 = arith.constant 0 : i32
    %c0_i32_1 = arith.constant 0 : i32
    return %c0_i32, %c0_i32_0 : i32, i32
  }
  func.func @transform_8(%arg0: i32) -> (i32, i32) {
    %c0_i32 = arith.constant 0 : i32
    %c0_i32_0 = arith.constant 0 : i32
    return %c0_i32, %arg0 : i32, i32
  }
  func.func @transform_9(%arg0: i32) -> (i32, i32) {
    %c0_i32 = arith.constant 0 : i32
    %c0_i32_0 = arith.constant 0 : i32
    return %c0_i32, %arg0 : i32, i32
  }
}

</mosaic_0001>

<llo_original>
// kernel: tpu_custom_call.1
$region0: #{tpu_custom_call.1}
  #allocation0 [shape = 'u32[]', space=smem, size = 0x4, offset = 0x4, fixed_abs, tag = 'smem constant byte address 0x4 - core index']
  #allocation1 [shape = 'u32[144,128]{1,0:T(1,128)}', space=vmem, size = 0x12000, scoped, tag = 'internal scratch']
  %s0 = inlined_call_operand.vmem [shape: f32[4,128], index: 0, kind: input, shape index: {}]
  %s1 = inlined_call_operand.vmem [shape: f32[16,128], index: 1, kind: input, shape index: {}]
  %s2 = inlined_call_operand.vmem [shape: f32[32,4], index: 2, kind: input, shape index: {}]
  %s3 = inlined_call_operand.vmem [shape: f32[32,1], index: 3, kind: input, shape index: {}]
  %s4 = inlined_call_operand.vmem [shape: f32[3,32], index: 4, kind: input, shape index: {}]
  %s5 = inlined_call_operand.vmem [shape: f32[3,1], index: 5, kind: input, shape index: {}]
  %s6 = inlined_call_operand.vmem [shape: f32[16,3], index: 6, kind: input, shape index: {}]
  %s7 = inlined_call_operand.vmem [shape: f32[1,4], index: 7, kind: input, shape index: {}]
  %s8 = inlined_call_operand.hbm [shape: f32[4,128], index: 8, kind: output, shape index: {0}]
  %s9 = inlined_call_operand.hbm [shape: f32[16,128], index: 9, kind: output, shape index: {1}]
  %10 = xla_tuple %s8, %s9
  %s11 = sld [smem:[#allocation0]]
  $region50: #{tpu_custom_call.1} parent=0
    _
  %s13 = ssub.s32 1, %s11
  %s14 = scalar_select 0, %s13, %s11
  $region1: #{tpu_custom_call.1} parent=0
    #allocation2 [shape = 'u8[2048]{0}', space=vmem, size = 0x800, scoped, tag = 'output window, operand 0, single buffered']
    #allocation3 [shape = 's32[1]{0}', space=sflag, size = 0x4, scoped, tag = 'scoped memory for tpu_custom_call.1']
    #allocation4 [shape = 'u8[8192]{0}', space=vmem, size = 0x2000, scoped, tag = 'output window, operand 1, single buffered']
    #allocation5 [shape = 's32[1]{0}', space=sflag, size = 0x4, scoped, tag = 'scoped memory for tpu_custom_call.1']
    %15 = vsyncpa [#allocation3], 0
    %16 = vsyncpa [#allocation5], 0
    // Predicated region
    $region2: #{tpu_custom_call.1} parent=1 // pred_check
      _
    $region3: #{tpu_custom_call.1} parent=1 // pred_check_branch
      %18 = sbr.rel (0) target = $region5
    $region4: #{tpu_custom_call.1} parent=1 // pred_region
      _
    $region5: #{tpu_custom_call.1} parent=1 // pred_fallthru
      _
    // Predicated region
    $region6: #{tpu_custom_call.1} parent=1 // pred_check
      _
    $region7: #{tpu_custom_call.1} parent=1 // pred_check_branch
      %20 = sbr.rel (0) target = $region9
    $region8: #{tpu_custom_call.1} parent=1 // pred_region
      _
    $region9: #{tpu_custom_call.1} parent=1 // pred_fallthru
      _
    // Predicated region
    $region10: #{tpu_custom_call.1} parent=1 // pred_check
      _
    $region11: #{tpu_custom_call.1} parent=1 // pred_check_branch
      %22 = sbr.rel (0) target = $region13
    $region12: #{tpu_custom_call.1} parent=1 // pred_region
      _
    $region13: #{tpu_custom_call.1} parent=1 // pred_fallthru
      _
    // Predicated region
    $region14: #{tpu_custom_call.1} parent=1 // pred_check
      _
    $region15: #{tpu_custom_call.1} parent=1 // pred_check_branch
      %24 = sbr.rel (0) target = $region17
    $region16: #{tpu_custom_call.1} parent=1 // pred_region
      _
    $region17: #{tpu_custom_call.1} parent=1 // pred_fallthru
      _
    // Predicated region
    $region18: #{tpu_custom_call.1} parent=1 // pred_check
      _
    $region19: #{tpu_custom_call.1} parent=1 // pred_check_branch
      %26 = sbr.rel (0) target = $region21
    $region20: #{tpu_custom_call.1} parent=1 // pred_region
      _
    $region21: #{tpu_custom_call.1} parent=1 // pred_fallthru
      _
    // Predicated region
    $region22: #{tpu_custom_call.1} parent=1 // pred_check
      _
    $region23: #{tpu_custom_call.1} parent=1 // pred_check_branch
      %28 = sbr.rel (0) target = $region25
    $region24: #{tpu_custom_call.1} parent=1 // pred_region
      _
    $region25: #{tpu_custom_call.1} parent=1 // pred_fallthru
      _
    // Predicated region
    $region26: #{tpu_custom_call.1} parent=1 // pred_check
      _
    $region27: #{tpu_custom_call.1} parent=1 // pred_check_branch
      %30 = sbr.rel (0) target = $region29
    $region28: #{tpu_custom_call.1} parent=1 // pred_region
      _
    $region29: #{tpu_custom_call.1} parent=1 // pred_fallthru
      _
    // Predicated region
    $region30: #{tpu_custom_call.1} parent=1 // pred_check
      _
    $region31: #{tpu_custom_call.1} parent=1 // pred_check_branch
      %32 = sbr.rel (0) target = $region33
    $region32: #{tpu_custom_call.1} parent=1 // pred_region
      _
    $region33: #{tpu_custom_call.1} parent=1 // pred_fallthru
      _
    %v33 = vld [vmem:[%s0] sm:$0x1]
    %v34 = vld [vmem:[%s0 + $0x1] sm:$0x1]
    %v35 = vld [vmem:[%s0 + $0x2] sm:$0x1]
    %v36 = vld [vmem:[%s0 + $0x3] sm:$0x1]
    %v37 = vld [vmem:[%s2] sm:$0xff]
    %v38 = vld [vmem:[%s2 + $0x8] sm:$0xff]
    %v39 = vld [vmem:[%s2 + $0x10] sm:$0xff]
    %v40 = vld [vmem:[%s2 + $0x18] sm:$0xff]
    %42 = vset.pattern.permute.xlu0 0
    %43 = vperm.xlu0 %42, %v37
    %v44 = vpop.permute.xlu0 %43
    %47 = vset.pattern.permute.xlu0 0
    %48 = vperm.xlu0 %47, %v38
    %v49 = vpop.permute.xlu0 %48
    %52 = vset.pattern.permute.xlu0 0
    %53 = vperm.xlu0 %52, %v39
    %v54 = vpop.permute.xlu0 %53
    %57 = vset.pattern.permute.xlu0 0
    %58 = vperm.xlu0 %57, %v40
    %v59 = vpop.permute.xlu0 %58
    %v61 = vlaneseq
    %v62 = vshrl.u32 %v61, 7
    %v63 = vsub.s32 0, %v62
    %v64 = vrot.slane %v33, %v63
    %v65 = vmul.f32 %v44, %v64
    %v66 = vmul.f32 %v49, %v64
    %v67 = vmul.f32 %v54, %v64
    %v68 = vmul.f32 %v59, %v64
    %v69 = vld [vmem:[%s3] sm:$0xff]
    %v70 = vld [vmem:[%s3 + $0x8] sm:$0xff]
    %v71 = vld [vmem:[%s3 + $0x10] sm:$0xff]
    %v72 = vld [vmem:[%s3 + $0x18] sm:$0xff]
    %74 = vset.pattern.permute.xlu0 0
    %75 = vperm.xlu0 %74, %v69
    %v76 = vpop.permute.xlu0 %75
    %79 = vset.pattern.permute.xlu0 0
    %80 = vperm.xlu0 %79, %v70
    %v81 = vpop.permute.xlu0 %80
    %84 = vset.pattern.permute.xlu0 0
    %85 = vperm.xlu0 %84, %v71
    %v86 = vpop.permute.xlu0 %85
    %89 = vset.pattern.permute.xlu0 0
    %90 = vperm.xlu0 %89, %v72
    %v91 = vpop.permute.xlu0 %90
    %v93 = vadd.f32 %v65, %v76
    %v94 = vadd.f32 %v66, %v81
    %v95 = vadd.f32 %v67, %v86
    %v96 = vadd.f32 %v68, %v91
    %97 = vset.pattern.permute.xlu0 1
    %98 = vperm.xlu0 %97, %v37
    %v99 = vpop.permute.xlu0 %98
    %101 = vset.pattern.permute.xlu0 1
    %102 = vperm.xlu0 %101, %v38
    %v103 = vpop.permute.xlu0 %102
    %105 = vset.pattern.permute.xlu0 1
    %106 = vperm.xlu0 %105, %v39
    %v107 = vpop.permute.xlu0 %106
    %109 = vset.pattern.permute.xlu0 1
    %110 = vperm.xlu0 %109, %v40
    %v111 = vpop.permute.xlu0 %110
    %v113 = vlaneseq
    %v114 = vshrl.u32 %v113, 7
    %v115 = vsub.s32 0, %v114
    %v116 = vrot.slane %v34, %v115
    %v117 = vmul.f32 %v99, %v116
    %v118 = vmul.f32 %v103, %v116
    %v119 = vmul.f32 %v107, %v116
    %v120 = vmul.f32 %v111, %v116
    %v121 = vadd.f32 %v93, %v117
    %v122 = vadd.f32 %v94, %v118
    %v123 = vadd.f32 %v95, %v119
    %v124 = vadd.f32 %v96, %v120
    %125 = vset.pattern.permute.xlu0 2
    %126 = vperm.xlu0 %125, %v37
    %v127 = vpop.permute.xlu0 %126
    %129 = vset.pattern.permute.xlu0 2
    %130 = vperm.xlu0 %129, %v38
    %v131 = vpop.permute.xlu0 %130
    %133 = vset.pattern.permute.xlu0 2
    %134 = vperm.xlu0 %133, %v39
    %v135 = vpop.permute.xlu0 %134
    %137 = vset.pattern.permute.xlu0 2
    %138 = vperm.xlu0 %137, %v40
    %v139 = vpop.permute.xlu0 %138
    %v141 = vlaneseq
    %v142 = vshrl.u32 %v141, 7
    %v143 = vsub.s32 0, %v142
    %v144 = vrot.slane %v35, %v143
    %v145 = vmul.f32 %v127, %v144
    %v146 = vmul.f32 %v131, %v144
    %v147 = vmul.f32 %v135, %v144
    %v148 = vmul.f32 %v139, %v144
    %v149 = vadd.f32 %v121, %v145
    %v150 = vadd.f32 %v122, %v146
    %v151 = vadd.f32 %v123, %v147
    %v152 = vadd.f32 %v124, %v148
    %153 = vset.pattern.permute.xlu0 3
    %154 = vperm.xlu0 %153, %v37
    %v155 = vpop.permute.xlu0 %154
    %157 = vset.pattern.permute.xlu0 3
    %158 = vperm.xlu0 %157, %v38
    %v159 = vpop.permute.xlu0 %158
    %161 = vset.pattern.permute.xlu0 3
    %162 = vperm.xlu0 %161, %v39
    %v163 = vpop.permute.xlu0 %162
    %165 = vset.pattern.permute.xlu0 3
    %166 = vperm.xlu0 %165, %v40
    %v167 = vpop.permute.xlu0 %166
    %v169 = vlaneseq
    %v170 = vshrl.u32 %v169, 7
    %v171 = vsub.s32 0, %v170
    %v172 = vrot.slane %v36, %v171
    %v173 = vmul.f32 %v155, %v172
    %v174 = vmul.f32 %v159, %v172
    %v175 = vmul.f32 %v163, %v172
    %v176 = vmul.f32 %v167, %v172
    %v177 = vadd.f32 %v149, %v173
    %v178 = vadd.f32 %v150, %v174
    %v179 = vadd.f32 %v151, %v175
    %v180 = vadd.f32 %v152, %v176
    %v181 = vtanh.pop %v177
    %v182 = vtanh.pop %v178
    %v183 = vtanh.pop %v179
    %v184 = vtanh.pop %v180
    %v185 = vld [vmem:[%s4] sm:$0x7]
    %v186 = vld [vmem:[%s5] sm:$0x7]
    %188 = vset.pattern.permute.xlu0 0
    %189 = vperm.xlu0 %188, %v186
    %v190 = vpop.permute.xlu0 %189
    %vm192 = vcmask 261120
    %v194 = vsel %vm192, %v185, 0
    %196 = vmatprep.subr.mxu0 0.0
    %197 = vmatpush1.msra.mxu0 %v181
    %198 = vmatprep.subr.mxu0 0.0
    %199 = vmatpush1.msra.mxu0 %v182
    %200 = vmatprep.subr.mxu0 0.0
    %201 = vmatpush1.msra.mxu0 %v183
    %202 = vmatprep.subr.mxu0 0.0
    %203 = vmatpush1.msra.mxu0 %v184
    %204 = vmatprep.subr.mxu0 0.0
    %205 = vmatpush1.msra.mxu0 0.0
    %206 = vmatprep.subr.mxu0 0.0
    %207 = vmatpush1.msra.mxu0 0.0
    %208 = vmatprep.subr.mxu0 0.0
    %209 = vmatpush1.msra.mxu0 0.0
    %210 = vmatprep.subr.mxu0 0.0
    %211 = vmatpush1.msra.mxu0 0.0
    %212 = vmatprep.subr.mxu0 0.0
    %213 = vmatpush1.msra.mxu0 0.0
    %214 = vmatprep.subr.mxu0 0.0
    %215 = vmatpush1.msra.mxu0 0.0
    %216 = vmatprep.subr.mxu0 0.0
    %217 = vmatpush1.msra.mxu0 0.0
    %218 = vmatprep.subr.mxu0 0.0
    %219 = vmatpush1.msra.mxu0 0.0
    %220 = vmatprep.subr.mxu0 0.0
    %221 = vmatpush1.msra.mxu0 0.0
    %222 = vmatprep.subr.mxu0 0.0
    %223 = vmatpush1.msra.mxu0 0.0
    %224 = vmatprep.subr.mxu0 0.0
    %225 = vmatpush1.msra.mxu0 0.0
    %226 = vmatprep.subr.mxu0 0.0
    %227 = vmatpush1.msra.mxu0 0.0
    %228 = vmatprep.subr.mxu0 0.0
    %229 = vmatpush1.msra.mxu0 0.0
    %230 = vmatprep.subr.mxu0 0.0
    %231 = vmatpush1.msra.mxu0 0.0
    %232 = vmatprep.subr.mxu0 0.0
    %233 = vmatpush1.msra.mxu0 0.0
    %234 = vmatprep.subr.mxu0 0.0
    %235 = vmatpush1.msra.mxu0 0.0
    %236 = vmatprep.subr.mxu0 0.0
    %237 = vmatpush1.msra.mxu0 0.0
    %238 = vmatprep.subr.mxu0 0.0
    %239 = vmatpush1.msra.mxu0 0.0
    %240 = vmatprep.subr.mxu0 0.0
    %241 = vmatpush1.msra.mxu0 0.0
    %242 = vmatprep.subr.mxu0 0.0
    %243 = vmatpush1.msra.mxu0 0.0
    %244 = vmatprep.subr.mxu0 0.0
    %245 = vmatpush1.msra.mxu0 0.0
    %246 = vmatprep.subr.mxu0 0.0
    %247 = vmatpush1.msra.mxu0 0.0
    %248 = vmatprep.subr.mxu0 0.0
    %249 = vmatpush1.msra.mxu0 0.0
    %250 = vmatprep.subr.mxu0 0.0
    %251 = vmatpush1.msra.mxu0 0.0
    %252 = vmatprep.subr.mxu0 0.0
    %253 = vmatpush1.msra.mxu0 0.0
    %254 = vmatprep.subr.mxu0 0.0
    %255 = vmatpush1.msra.mxu0 0.0
    %256 = vmatprep.subr.mxu0 0.0
    %257 = vmatpush1.msra.mxu0 0.0
    %258 = vmatprep.subr.mxu0 0.0
    %259 = vmatpush1.msra.mxu0 0.0
    %260 = vmatprep.mubr.f32.mxu0 0.0
    %261 = vmatmul.mubr.f32.gmra.mrb[0].mxu0 %v194
    %v262 = vpop.f32.mrb[0].mxu0
    %v263 = vadd.f32 %v190, %v262
    %v264 = vpop.f32.mrb[0].mxu0
    %265 = vdwg.mxu0
    %v267 = vrot.slane %v263, 1
    %v269 = vmax.f32 %v263, %v267
    %v270 = vrot.slane %v263, 2
    %v272 = vmax.f32 %v269, %v270
    %v273 = vsub.f32 %v263, %v272
    %v274 = vmul.f32 %v273, 1.442695
    %v275 = vpow.pop %v274
    %v277 = vrot.slane %v272, 7
    %v279 = vsub.f32 %v263, %v277
    %v280 = vmul.f32 %v279, 1.442695
    %v281 = vpow.pop %v280
    %v282 = vrot.slane %v272, 6
    %v284 = vsub.f32 %v263, %v282
    %v285 = vmul.f32 %v284, 1.442695
    %v286 = vpow.pop %v285
    %v288 = vrot.slane %v281, 1
    %v290 = vadd.f32 %v275, %v288
    %v292 = vrot.slane %v286, 2
    %v294 = vadd.f32 %v290, %v292
    %v295 = vrcp.pop %v294
    %v296 = vmul.f32 1.0, %v295
    %v297 = vmul.f32 %v275, %v296
    %v299 = vrot.slane %v296, 7
    %v301 = vmul.f32 %v281, %v299
    %v302 = vrot.slane %v296, 6
    %v304 = vmul.f32 %v286, %v302
    %v305 = vld [vmem:[%s6] sm:$0xff]
    %v306 = vld [vmem:[%s6 + $0x8] sm:$0xff]
    %308 = vset.pattern.permute.xlu0 0
    %309 = vperm.xlu0 %308, %v305
    %v310 = vpop.permute.xlu0 %309
    %v312 = vmul.f32 %v310, %v297
    %313 = vset.pattern.permute.xlu0 1
    %314 = vperm.xlu0 %313, %v305
    %v315 = vpop.permute.xlu0 %314
    %v318 = vrot.slane %v301, 1
    %v320 = vmul.f32 %v315, %v318
    %v321 = vadd.f32 %v312, %v320
    %322 = vset.pattern.permute.xlu0 2
    %323 = vperm.xlu0 %322, %v305
    %v324 = vpop.permute.xlu0 %323
    %v327 = vrot.slane %v304, 2
    %v329 = vmul.f32 %v324, %v327
    %v330 = vadd.f32 %v321, %v329
    %v332 = vrot.slane %v297, 7
    %v334 = vmul.f32 %v310, %v332
    %v335 = vmul.f32 %v315, %v301
    %v336 = vadd.f32 %v334, %v335
    %v337 = vrot.slane %v304, 1
    %v339 = vmul.f32 %v324, %v337
    %v340 = vadd.f32 %v336, %v339
    %v341 = vrot.slane %v297, 6
    %v343 = vmul.f32 %v310, %v341
    %v344 = vrot.slane %v301, 7
    %v346 = vmul.f32 %v315, %v344
    %v347 = vadd.f32 %v343, %v346
    %v348 = vmul.f32 %v324, %v304
    %v349 = vadd.f32 %v347, %v348
    %v350 = vrot.slane %v297, 5
    %v352 = vmul.f32 %v310, %v350
    %v353 = vrot.slane %v301, 6
    %v355 = vmul.f32 %v315, %v353
    %v356 = vadd.f32 %v352, %v355
    %v357 = vrot.slane %v304, 7
    %v359 = vmul.f32 %v324, %v357
    %v360 = vadd.f32 %v356, %v359
    %v361 = vrot.slane %v297, 4
    %v363 = vmul.f32 %v310, %v361
    %v364 = vrot.slane %v301, 5
    %v366 = vmul.f32 %v315, %v364
    %v367 = vadd.f32 %v363, %v366
    %v368 = vrot.slane %v304, 6
    %v370 = vmul.f32 %v324, %v368
    %v371 = vadd.f32 %v367, %v370
    %v372 = vrot.slane %v297, 3
    %v374 = vmul.f32 %v310, %v372
    %v375 = vrot.slane %v301, 4
    %v377 = vmul.f32 %v315, %v375
    %v378 = vadd.f32 %v374, %v377
    %v379 = vrot.slane %v304, 5
    %v381 = vmul.f32 %v324, %v379
    %v382 = vadd.f32 %v378, %v381
    %v383 = vrot.slane %v297, 2
    %v385 = vmul.f32 %v310, %v383
    %v386 = vrot.slane %v301, 3
    %v388 = vmul.f32 %v315, %v386
    %v389 = vadd.f32 %v385, %v388
    %v390 = vrot.slane %v304, 4
    %v392 = vmul.f32 %v324, %v390
    %v393 = vadd.f32 %v389, %v392
    %v394 = vrot.slane %v297, 1
    %v396 = vmul.f32 %v310, %v394
    %v397 = vrot.slane %v301, 2
    %v399 = vmul.f32 %v315, %v397
    %v400 = vadd.f32 %v396, %v399
    %v401 = vrot.slane %v304, 3
    %v403 = vmul.f32 %v324, %v401
    %v404 = vadd.f32 %v400, %v403
    %406 = vset.pattern.permute.xlu0 0
    %407 = vperm.xlu0 %406, %v306
    %v408 = vpop.permute.xlu0 %407
    %v410 = vmul.f32 %v408, %v297
    %411 = vset.pattern.permute.xlu0 1
    %412 = vperm.xlu0 %411, %v306
    %v413 = vpop.permute.xlu0 %412
    %v415 = vmul.f32 %v413, %v318
    %v416 = vadd.f32 %v410, %v415
    %417 = vset.pattern.permute.xlu0 2
    %418 = vperm.xlu0 %417, %v306
    %v419 = vpop.permute.xlu0 %418
    %v421 = vmul.f32 %v419, %v327
    %v422 = vadd.f32 %v416, %v421
    %v423 = vmul.f32 %v408, %v332
    %v424 = vmul.f32 %v413, %v301
    %v425 = vadd.f32 %v423, %v424
    %v426 = vmul.f32 %v419, %v337
    %v427 = vadd.f32 %v425, %v426
    %v428 = vmul.f32 %v408, %v341
    %v429 = vmul.f32 %v413, %v344
    %v430 = vadd.f32 %v428, %v429
    %v431 = vmul.f32 %v419, %v304
    %v432 = vadd.f32 %v430, %v431
    %v433 = vmul.f32 %v408, %v350
    %v434 = vmul.f32 %v413, %v353
    %v435 = vadd.f32 %v433, %v434
    %v436 = vmul.f32 %v419, %v357
    %v437 = vadd.f32 %v435, %v436
    %v438 = vmul.f32 %v408, %v361
    %v439 = vmul.f32 %v413, %v364
    %v440 = vadd.f32 %v438, %v439
    %v441 = vmul.f32 %v419, %v368
    %v442 = vadd.f32 %v440, %v441
    %v443 = vmul.f32 %v408, %v372
    %v444 = vmul.f32 %v413, %v375
    %v445 = vadd.f32 %v443, %v444
    %v446 = vmul.f32 %v419, %v379
    %v447 = vadd.f32 %v445, %v446
    %v448 = vmul.f32 %v408, %v383
    %v449 = vmul.f32 %v413, %v386
    %v450 = vadd.f32 %v448, %v449
    %v451 = vmul.f32 %v419, %v390
    %v452 = vadd.f32 %v450, %v451
    %v453 = vmul.f32 %v408, %v394
    %v454 = vmul.f32 %v413, %v397
    %v455 = vadd.f32 %v453, %v454
    %v456 = vmul.f32 %v419, %v401
    %v457 = vadd.f32 %v455, %v456
    %v458 = vmul.f32 %v330, %v33
    %v460 = vrot.slane %v34, 7
    %v462 = vmul.f32 %v340, %v460
    %v464 = vrot.slane %v462, 1
    %v466 = vadd.f32 %v458, %v464
    %v468 = vrot.slane %v35, 6
    %v470 = vmul.f32 %v349, %v468
    %v472 = vrot.slane %v470, 2
    %v474 = vadd.f32 %v466, %v472
    %v476 = vrot.slane %v36, 5
    %v478 = vmul.f32 %v360, %v476
    %v480 = vrot.slane %v478, 3
    %v482 = vadd.f32 %v474, %v480
    %v484 = vrot.slane %v33, 4
    %v486 = vmul.f32 %v371, %v484
    %v487 = vrot.slane %v34, 3
    %v489 = vmul.f32 %v382, %v487
    %v491 = vrot.slane %v489, 1
    %v493 = vadd.f32 %v486, %v491
    %v494 = vrot.slane %v35, 2
    %v496 = vmul.f32 %v393, %v494
    %v498 = vrot.slane %v496, 2
    %v500 = vadd.f32 %v493, %v498
    %v501 = vrot.slane %v36, 1
    %v503 = vmul.f32 %v404, %v501
    %v505 = vrot.slane %v503, 3
    %v507 = vadd.f32 %v500, %v505
    %v508 = vmul.f32 %v422, %v33
    %v509 = vmul.f32 %v427, %v460
    %v511 = vrot.slane %v509, 1
    %v513 = vadd.f32 %v508, %v511
    %v514 = vmul.f32 %v432, %v468
    %v516 = vrot.slane %v514, 2
    %v518 = vadd.f32 %v513, %v516
    %v519 = vmul.f32 %v437, %v476
    %v521 = vrot.slane %v519, 3
    %v523 = vadd.f32 %v518, %v521
    %v524 = vmul.f32 %v442, %v484
    %v525 = vmul.f32 %v447, %v487
    %v527 = vrot.slane %v525, 1
    %v529 = vadd.f32 %v524, %v527
    %v530 = vmul.f32 %v452, %v494
    %v532 = vrot.slane %v530, 2
    %v534 = vadd.f32 %v529, %v532
    %v535 = vmul.f32 %v457, %v501
    %v537 = vrot.slane %v535, 3
    %v539 = vadd.f32 %v534, %v537
    %v541 = vrot.slane %v507, 3
    %v544 = vrot.slane %v523, 6
    %v547 = vrot.slane %v539, 1
    %vm549 = vcmask 1040384
    %v550 = vsel %vm549, %v482, %v541
    %vm551 = vcmask 1041408
    %v552 = vsel %vm551, %v550, %v544
    %vm553 = vcmask 1042432
    %v554 = vsel %vm553, %v552, %v547
    %555 = vst [vmem:[#allocation2] sm:$0xf] %v554
    %v556 = vld [vmem:[%s7] sm:$0x1]
    %v557 = vld [vmem:[%s1] sm:$0x1]
    %v558 = vmul.f32 %v330, %v557
    %v559 = vld [vmem:[%s1 + $0x4] sm:$0x1]
    %v561 = vrot.slane %v559, 7
    %v563 = vmul.f32 %v340, %v561
    %v565 = vrot.slane %v563, 1
    %v567 = vadd.f32 %v558, %v565
    %v568 = vld [vmem:[%s1 + $0x8] sm:$0x1]
    %v570 = vrot.slane %v568, 6
    %v572 = vmul.f32 %v349, %v570
    %v574 = vrot.slane %v572, 2
    %v576 = vadd.f32 %v567, %v574
    %v577 = vld [vmem:[%s1 + $0xc] sm:$0x1]
    %v579 = vrot.slane %v577, 5
    %v581 = vmul.f32 %v360, %v579
    %v583 = vrot.slane %v581, 3
    %v585 = vadd.f32 %v576, %v583
    %v586 = vadd.f32 %v585, %v585
    %588 = vset.pattern.permute.xlu0 0
    %589 = vperm.xlu0 %588, %v556
    %v590 = vpop.permute.xlu0 %589
    %v592 = vlaneseq
    %v593 = vshrl.u32 %v592, 7
    %v594 = vsub.s32 0, %v593
    %v595 = vrot.slane %v590, %v594
    %v596 = vadd.f32 %v586, %v595
    %v597 = vld [vmem:[%s1 + $0x1] sm:$0x1]
    %v598 = vmul.f32 %v330, %v597
    %v599 = vld [vmem:[%s1 + $0x5] sm:$0x1]
    %v601 = vrot.slane %v599, 7
    %v603 = vmul.f32 %v340, %v601
    %v605 = vrot.slane %v603, 1
    %v607 = vadd.f32 %v598, %v605
    %v608 = vld [vmem:[%s1 + $0x9] sm:$0x1]
    %v610 = vrot.slane %v608, 6
    %v612 = vmul.f32 %v349, %v610
    %v614 = vrot.slane %v612, 2
    %v616 = vadd.f32 %v607, %v614
    %v617 = vld [vmem:[%s1 + $0xd] sm:$0x1]
    %v619 = vrot.slane %v617, 5
    %v621 = vmul.f32 %v360, %v619
    %v623 = vrot.slane %v621, 3
    %v625 = vadd.f32 %v616, %v623
    %v627 = vrot.slane %v557, 4
    %v629 = vmul.f32 %v371, %v627
    %v630 = vrot.slane %v559, 3
    %v632 = vmul.f32 %v382, %v630
    %v634 = vrot.slane %v632, 1
    %v636 = vadd.f32 %v629, %v634
    %v637 = vrot.slane %v568, 2
    %v639 = vmul.f32 %v393, %v637
    %v641 = vrot.slane %v639, 2
    %v643 = vadd.f32 %v636, %v641
    %v644 = vrot.slane %v577, 1
    %v646 = vmul.f32 %v404, %v644
    %v648 = vrot.slane %v646, 3
    %v650 = vadd.f32 %v643, %v648
    %v652 = vrot.slane %v650, 4
    %v654 = vadd.f32 %v625, %v652
    %v655 = vld [vmem:[%s1 + $0x2] sm:$0x1]
    %v656 = vmul.f32 %v330, %v655
    %v657 = vld [vmem:[%s1 + $0x6] sm:$0x1]
    %v659 = vrot.slane %v657, 7
    %v661 = vmul.f32 %v340, %v659
    %v663 = vrot.slane %v661, 1
    %v665 = vadd.f32 %v656, %v663
    %v666 = vld [vmem:[%s1 + $0xa] sm:$0x1]
    %v668 = vrot.slane %v666, 6
    %v670 = vmul.f32 %v349, %v668
    %v672 = vrot.slane %v670, 2
    %v674 = vadd.f32 %v665, %v672
    %v675 = vld [vmem:[%s1 + $0xe] sm:$0x1]
    %v677 = vrot.slane %v675, 5
    %v679 = vmul.f32 %v360, %v677
    %v681 = vrot.slane %v679, 3
    %v683 = vadd.f32 %v674, %v681
    %v684 = vmul.f32 %v422, %v557
    %v685 = vmul.f32 %v427, %v561
    %v687 = vrot.slane %v685, 1
    %v689 = vadd.f32 %v684, %v687
    %v690 = vmul.f32 %v432, %v570
    %v692 = vrot.slane %v690, 2
    %v694 = vadd.f32 %v689, %v692
    %v695 = vmul.f32 %v437, %v579
    %v697 = vrot.slane %v695, 3
    %v699 = vadd.f32 %v694, %v697
    %v700 = vadd.f32 %v683, %v699
    %v701 = vld [vmem:[%s1 + $0x3] sm:$0x1]
    %v702 = vmul.f32 %v330, %v701
    %v703 = vld [vmem:[%s1 + $0x7] sm:$0x1]
    %v705 = vrot.slane %v703, 7
    %v707 = vmul.f32 %v340, %v705
    %v709 = vrot.slane %v707, 1
    %v711 = vadd.f32 %v702, %v709
    %v712 = vld [vmem:[%s1 + $0xb] sm:$0x1]
    %v714 = vrot.slane %v712, 6
    %v716 = vmul.f32 %v349, %v714
    %v718 = vrot.slane %v716, 2
    %v720 = vadd.f32 %v711, %v718
    %v721 = vld [vmem:[%s1 + $0xf] sm:$0x1]
    %v723 = vrot.slane %v721, 5
    %v725 = vmul.f32 %v360, %v723
    %v727 = vrot.slane %v725, 3
    %v729 = vadd.f32 %v720, %v727
    %v730 = vmul.f32 %v442, %v627
    %v731 = vmul.f32 %v447, %v630
    %v733 = vrot.slane %v731, 1
    %v735 = vadd.f32 %v730, %v733
    %v736 = vmul.f32 %v452, %v637
    %v738 = vrot.slane %v736, 2
    %v740 = vadd.f32 %v735, %v738
    %v741 = vmul.f32 %v457, %v644
    %v743 = vrot.slane %v741, 3
    %v745 = vadd.f32 %v740, %v743
    %v747 = vrot.slane %v745, 4
    %v749 = vadd.f32 %v729, %v747
    %v751 = vrot.slane %v597, 4
    %v753 = vmul.f32 %v371, %v751
    %v754 = vrot.slane %v599, 3
    %v756 = vmul.f32 %v382, %v754
    %v758 = vrot.slane %v756, 1
    %v760 = vadd.f32 %v753, %v758
    %v761 = vrot.slane %v608, 2
    %v763 = vmul.f32 %v393, %v761
    %v765 = vrot.slane %v763, 2
    %v767 = vadd.f32 %v760, %v765
    %v768 = vrot.slane %v617, 1
    %v770 = vmul.f32 %v404, %v768
    %v772 = vrot.slane %v770, 3
    %v774 = vadd.f32 %v767, %v772
    %v775 = vadd.f32 %v774, %v774
    %776 = vset.pattern.permute.xlu0 1
    %777 = vperm.xlu0 %776, %v556
    %v778 = vpop.permute.xlu0 %777
    %v780 = vlaneseq
    %v781 = vshrl.u32 %v780, 7
    %v782 = vsub.s32 0, %v781
    %v783 = vrot.slane %v778, %v782
    %v784 = vadd.f32 %v775, %v783
    %v786 = vrot.slane %v655, 4
    %v788 = vmul.f32 %v371, %v786
    %v789 = vrot.slane %v657, 3
    %v791 = vmul.f32 %v382, %v789
    %v793 = vrot.slane %v791, 1
    %v795 = vadd.f32 %v788, %v793
    %v796 = vrot.slane %v666, 2
    %v798 = vmul.f32 %v393, %v796
    %v800 = vrot.slane %v798, 2
    %v802 = vadd.f32 %v795, %v800
    %v803 = vrot.slane %v675, 1
    %v805 = vmul.f32 %v404, %v803
    %v807 = vrot.slane %v805, 3
    %v809 = vadd.f32 %v802, %v807
    %v810 = vmul.f32 %v422, %v597
    %v811 = vmul.f32 %v427, %v601
    %v813 = vrot.slane %v811, 1
    %v815 = vadd.f32 %v810, %v813
    %v816 = vmul.f32 %v432, %v610
    %v818 = vrot.slane %v816, 2
    %v820 = vadd.f32 %v815, %v818
    %v821 = vmul.f32 %v437, %v619
    %v823 = vrot.slane %v821, 3
    %v825 = vadd.f32 %v820, %v823
    %v827 = vrot.slane %v825, 4
    %v829 = vadd.f32 %v809, %v827
    %v831 = vrot.slane %v701, 4
    %v833 = vmul.f32 %v371, %v831
    %v834 = vrot.slane %v703, 3
    %v836 = vmul.f32 %v382, %v834
    %v838 = vrot.slane %v836, 1
    %v840 = vadd.f32 %v833, %v838
    %v841 = vrot.slane %v712, 2
    %v843 = vmul.f32 %v393, %v841
    %v845 = vrot.slane %v843, 2
    %v847 = vadd.f32 %v840, %v845
    %v848 = vrot.slane %v721, 1
    %v850 = vmul.f32 %v404, %v848
    %v852 = vrot.slane %v850, 3
    %v854 = vadd.f32 %v847, %v852
    %v855 = vmul.f32 %v442, %v751
    %v856 = vmul.f32 %v447, %v754
    %v858 = vrot.slane %v856, 1
    %v860 = vadd.f32 %v855, %v858
    %v861 = vmul.f32 %v452, %v761
    %v863 = vrot.slane %v861, 2
    %v865 = vadd.f32 %v860, %v863
    %v866 = vmul.f32 %v457, %v768
    %v868 = vrot.slane %v866, 3
    %v870 = vadd.f32 %v865, %v868
    %v871 = vadd.f32 %v854, %v870
    %v872 = vmul.f32 %v422, %v655
    %v873 = vmul.f32 %v427, %v659
    %v875 = vrot.slane %v873, 1
    %v877 = vadd.f32 %v872, %v875
    %v878 = vmul.f32 %v432, %v668
    %v880 = vrot.slane %v878, 2
    %v882 = vadd.f32 %v877, %v880
    %v883 = vmul.f32 %v437, %v677
    %v885 = vrot.slane %v883, 3
    %v887 = vadd.f32 %v882, %v885
    %v888 = vadd.f32 %v887, %v887
    %889 = vset.pattern.permute.xlu0 2
    %890 = vperm.xlu0 %889, %v556
    %v891 = vpop.permute.xlu0 %890
    %v893 = vlaneseq
    %v894 = vshrl.u32 %v893, 7
    %v895 = vsub.s32 0, %v894
    %v896 = vrot.slane %v891, %v895
    %v897 = vadd.f32 %v888, %v896
    %v898 = vmul.f32 %v422, %v701
    %v899 = vmul.f32 %v427, %v705
    %v901 = vrot.slane %v899, 1
    %v903 = vadd.f32 %v898, %v901
    %v904 = vmul.f32 %v432, %v714
    %v906 = vrot.slane %v904, 2
    %v908 = vadd.f32 %v903, %v906
    %v909 = vmul.f32 %v437, %v723
    %v911 = vrot.slane %v909, 3
    %v913 = vadd.f32 %v908, %v911
    %v914 = vmul.f32 %v442, %v786
    %v915 = vmul.f32 %v447, %v789
    %v917 = vrot.slane %v915, 1
    %v919 = vadd.f32 %v914, %v917
    %v920 = vmul.f32 %v452, %v796
    %v922 = vrot.slane %v920, 2
    %v924 = vadd.f32 %v919, %v922
    %v925 = vmul.f32 %v457, %v803
    %v927 = vrot.slane %v925, 3
    %v929 = vadd.f32 %v924, %v927
    %v931 = vrot.slane %v929, 4
    %v933 = vadd.f32 %v913, %v931
    %v934 = vmul.f32 %v442, %v831
    %v935 = vmul.f32 %v447, %v834
    %v937 = vrot.slane %v935, 1
    %v939 = vadd.f32 %v934, %v937
    %v940 = vmul.f32 %v452, %v841
    %v942 = vrot.slane %v940, 2
    %v944 = vadd.f32 %v939, %v942
    %v945 = vmul.f32 %v457, %v848
    %v947 = vrot.slane %v945, 3
    %v949 = vadd.f32 %v944, %v947
    %v950 = vadd.f32 %v949, %v949
    %951 = vset.pattern.permute.xlu0 3
    %952 = vperm.xlu0 %951, %v556
    %v953 = vpop.permute.xlu0 %952
    %v955 = vlaneseq
    %v956 = vshrl.u32 %v955, 7
    %v957 = vsub.s32 0, %v956
    %v958 = vrot.slane %v953, %v957
    %v959 = vadd.f32 %v950, %v958
    %v961 = vrot.slane %v654, 7
    %v964 = vrot.slane %v700, 6
    %v967 = vrot.slane %v749, 5
    %v969 = vrot.slane %v654, 4
    %v972 = vrot.slane %v784, 7
    %v975 = vrot.slane %v829, 6
    %v978 = vrot.slane %v871, 5
    %v980 = vsel %vm549, %v596, %v961
    %v981 = vsel %vm551, %v980, %v964
    %v982 = vsel %vm553, %v981, %v967
    %vm983 = vcmask 1043456
    %v984 = vsel %vm983, %v982, %v969
    %vm985 = vcmask 1044480
    %v986 = vsel %vm985, %v984, %v972
    %vm987 = vcmask 1045504
    %v988 = vsel %vm987, %v986, %v975
    %vm989 = vcmask 1046528
    %v990 = vsel %vm989, %v988, %v978
    %991 = vst [vmem:[#allocation4] sm:$0xff] %v990
    %v992 = vrot.slane %v829, 3
    %v995 = vrot.slane %v897, 6
    %v998 = vrot.slane %v933, 5
    %v1000 = vrot.slane %v749, 4
    %v1002 = vrot.slane %v871, 7
    %v1004 = vrot.slane %v933, 2
    %v1007 = vrot.slane %v959, 5
    %v1009 = vsel %vm549, %v700, %v992
    %v1010 = vsel %vm551, %v1009, %v995
    %v1011 = vsel %vm553, %v1010, %v998
    %v1012 = vsel %vm983, %v1011, %v1000
    %v1013 = vsel %vm985, %v1012, %v1002
    %v1014 = vsel %vm987, %v1013, %v1004
    %v1015 = vsel %vm989, %v1014, %v1007
    %1016 = vst [vmem:[#allocation4 + $0x8] sm:$0xff] %v1015
    // Predicated region
    $region34: #{tpu_custom_call.1} parent=1 // pred_check
      _
    $region35: #{tpu_custom_call.1} parent=1 // pred_check_branch
      %1018 = sbr.rel (0) target = $region37
    $region36: #{tpu_custom_call.1} parent=1 // pred_region
      %s1020 = ssub.s32 64, 64
      %1021 = vsyncadd [#allocation3], %s1020
      %s1023 = sshll.u32 [#allocation2], 4
      %s1024 = int_to_ptr.vmem [resolvable:$true] %s1023
      %1026 = dma.vmem_to_hbm [thread:$0]  %s1024, 64, %s8, [#allocation3]
    $region37: #{tpu_custom_call.1} parent=1 // pred_fallthru
      _
    // Predicated region
    $region38: #{tpu_custom_call.1} parent=1 // pred_check
      _
    $region39: #{tpu_custom_call.1} parent=1 // pred_check_branch
      %1028 = sbr.rel (0) target = $region41
    $region40: #{tpu_custom_call.1} parent=1 // pred_region
      %s1030 = ssub.s32 256, 256
      %1031 = vsyncadd [#allocation5], %s1030
      %s1032 = sshll.u32 [#allocation4], 4
      %s1033 = int_to_ptr.vmem [resolvable:$true] %s1032
      %1038 = dma.vmem_to_hbm [thread:$0]  %s1033, 256, %s9, [#allocation5], 128, 128, 8
    $region41: #{tpu_custom_call.1} parent=1 // pred_fallthru
      _
    // Predicated region
    $region42: #{tpu_custom_call.1} parent=1 // pred_check
      _
    $region43: #{tpu_custom_call.1} parent=1 // pred_check_branch
      %1040 = sbr.rel (0) target = $region45
    $region44: #{tpu_custom_call.1} parent=1 // pred_region
      %1041 = dma.done [#allocation3], 64
    $region45: #{tpu_custom_call.1} parent=1 // pred_fallthru
      _
    // Predicated region
    $region46: #{tpu_custom_call.1} parent=1 // pred_check
      _
    $region47: #{tpu_custom_call.1} parent=1 // pred_check_branch
      %1043 = sbr.rel (0) target = $region49
    $region48: #{tpu_custom_call.1} parent=1 // pred_region
      %1044 = dma.done [#allocation5], 256
    $region49: #{tpu_custom_call.1} parent=1 // pred_fallthru
      _
    %1045 = vsyncpa [#allocation3], 1
    %1046 = vsyncpa [#allocation5], 1

</llo_original>
